<compile_context>
chip_gen: v7x
topology: tpu7x:2x2x1
jax: 0.10.0
libtpu: 0.0.40
codegen_flags: <defaults>
</compile_context>

<pallas_src>
import numpy as np

import jax
import jax.numpy as jnp
from jax.experimental import pallas as pl
from jax.experimental.pallas import tpu as pltpu

_OUT_PAD = 128  # lane-dense width of the fused (mu | logvar) head output


# ----------------------------------------------------------------------------
# Fused encoder kernel: conv1 -> conv2 -> conv3 -> {fc_mu, fc_logvar}
# ----------------------------------------------------------------------------
def _encoder_kernel(x_ref,
                    s1_ref, w1_ref, b1_ref,
                    s2_ref, w2_ref, b2_ref,
                    s3_ref, w3_ref, b3_ref,
                    wfc_ref, bfc_ref,
                    out_ref):
    """One image per grid step; activations never leave VMEM/vregs.

    Activations use "flattened NHWC" layout: shape (rows, cols * cin) with
    element [r, w*cin + ci] = x[ci, r, w].  Each conv layer is
        y = relu( sum_kh (S_kh @ X) @ B_kh + bias )
    with precomputed row-selection (S) and banded (B) matrices, so the
    stride-2 window and zero padding become plain MXU matmuls.
    """

    def conv_relu(x_val, s_ref, band_ref, bias_ref):
        ho = s_ref.shape[1]                 # output rows
        fo = band_ref.shape[2]              # output cols * cout
        x_bf = x_val.astype(jnp.bfloat16)
        acc = jnp.zeros((ho, fo), jnp.float32)
        for kh in range(s_ref.shape[0]):    # 4 kernel rows, unrolled
            rows = jnp.dot(s_ref[kh], x_bf,
                           preferred_element_type=jnp.float32)
            acc = acc + jnp.dot(rows.astype(jnp.bfloat16), band_ref[kh],
                                preferred_element_type=jnp.float32)
        return jnp.maximum(acc + bias_ref[...], 0.0)

    h1 = conv_relu(x_ref[0], s1_ref, w1_ref, b1_ref)    # (H/2, (W/2)*c)
    h2 = conv_relu(h1,       s2_ref, w2_ref, b2_ref)    # (H/4, (W/4)*2c)
    h3 = conv_relu(h2,       s3_ref, w3_ref, b3_ref)    # (H/8, (W/8)*4c)

    # fused fc_mu | fc_logvar head -> single lane-dense (1, 128) store
    h3_bf = h3.astype(jnp.bfloat16)
    out_pad = wfc_ref.shape[2]
    acc = jnp.zeros((1, out_pad), jnp.float32)
    for i in range(wfc_ref.shape[0]):       # H/8 rows, unrolled
        acc = acc + jnp.dot(h3_bf[i:i + 1, :], wfc_ref[i],
                            preferred_element_type=jnp.float32)
    out_ref[0] = acc + bfc_ref[...]


# ----------------------------------------------------------------------------
# Forward wrapper (single pallas_call, grid over batch)
# ----------------------------------------------------------------------------
def encoder_forward(kparams, x_nchw, dim_z):
    """x_nchw: (N, 1, H, W) f32  ->  (mu, logvar), each (N, dim_z) f32."""
    N, cin, H, W = x_nchw.shape
    assert cin == 1, "Encoder.conv1 expects in_channels=1"
    x = x_nchw.reshape(N, H, W)
    out_pad = kparams["wfc"].shape[-1]

    def _full(arr):
        shape = tuple(arr.shape)
        nd = len(shape)
        return pl.BlockSpec(shape, lambda *_, _nd=nd: (0,) * _nd)

    weight_names = ["s1", "w1", "b1", "s2", "w2", "b2",
                    "s3", "w3", "b3", "wfc", "bfc"]
    weights = [kparams[k] for k in weight_names]

    out = pl.pallas_call(
        _encoder_kernel,
        out_shape=jax.ShapeDtypeStruct((N, 1, out_pad), jnp.float32),
        grid=(N,),
        in_specs=[pl.BlockSpec((1, H, W), lambda n: (n, 0, 0))]
                 + [_full(w) for w in weights],
        out_specs=pl.BlockSpec((1, 1, out_pad), lambda n: (n, 0, 0)),
        compiler_params=pltpu.CompilerParams(
            dimension_semantics=("parallel",),        # megacore over batch
            vmem_limit_bytes=32 * 1024 * 1024,
        ),
    )(x, *weights)

    out = out.reshape(N, out_pad)
    return out[:, :dim_z], out[:, dim_z:2 * dim_z]


# ----------------------------------------------------------------------------
# One-time parameter preprocessing (layout plumbing, NOT in the forward path)
# ----------------------------------------------------------------------------
def _row_select_mats(h_in):
    """S[kh, i, r] = 1  iff  r == 2*i + kh - 1  (stride 2, pad 1)."""
    ho = h_in // 2
    s = np.zeros((4, ho, h_in), np.float32)
    for kh in range(4):
        for i in range(ho):
            r = 2 * i + kh - 1
            if 0 <= r < h_in:
                s[kh, i, r] = 1.0
    return s


def _conv_banded_mats(w_oihw, w_in):
    """B[kh, wx*cin + ci, j*cout + co] = W[co, ci, kh, wx - 2j + 1] (pad 1)."""
    w_np = np.asarray(w_oihw, np.float32)
    cout, cin, ksz, _ = w_np.shape
    wo = w_in // 2
    band = np.zeros((ksz, w_in * cin, wo * cout), np.float32)
    for kh in range(ksz):
        for j in range(wo):
            for kw in range(ksz):
                wx = 2 * j + kw - 1
                if 0 <= wx < w_in:
                    band[kh, wx * cin:(wx + 1) * cin,
                         j * cout:(j + 1) * cout] = w_np[:, :, kh, kw].T
    return band


def prepare_kernel_params(params, h, w, c, dim_z, out_pad=_OUT_PAD):
    """Convert torch-layout weights to the fused kernel's layout (runs once)."""
    assert h % 8 == 0 and w % 8 == 0
    assert 2 * dim_z <= out_pad
    heights = (h, h // 2, h // 4)
    widths = (w, w // 2, w // 4)
    kp = {}
    for li in range(3):
        wt = params[f"conv{li + 1}_w"]
        bt = np.asarray(params[f"conv{li + 1}_b"], np.float32)
        kp[f"s{li + 1}"] = jnp.asarray(_row_select_mats(heights[li]), jnp.bfloat16)
        kp[f"w{li + 1}"] = jnp.asarray(_conv_banded_mats(wt, widths[li]), jnp.bfloat16)
        kp[f"b{li + 1}"] = jnp.asarray(np.tile(bt, widths[li] // 2)[None, :],
                                       jnp.float32)

    # Fused fc_mu | fc_logvar weight: rows permuted from torch's (c, h, w)
    # flatten order to the kernel's (h, w, c) order; output padded to 128 lanes.
    h3, w3, c3 = h // 8, w // 8, 4 * c
    wmu = np.asarray(params["fc_mu_w"], np.float32)       # (dim_z, feat)
    wlv = np.asarray(params["fc_logvar_w"], np.float32)
    wcat = np.concatenate([wmu, wlv], axis=0)             # (2*dim_z, feat)
    wcat = wcat.reshape(2 * dim_z, c3, h3, w3)
    wcat = np.transpose(wcat, (2, 3, 1, 0))               # (h3, w3, c3, 2*dim_z)
    wcat = wcat.reshape(h3, w3 * c3, 2 * dim_z)
    wfc = np.zeros((h3, w3 * c3, out_pad), np.float32)
    wfc[:, :, :2 * dim_z] = wcat
    bfc = np.zeros((1, out_pad), np.float32)
    bfc[0, :dim_z] = np.asarray(params["fc_mu_b"], np.float32)
    bfc[0, dim_z:2 * dim_z] = np.asarray(params["fc_logvar_b"], np.float32)
    kp["wfc"] = jnp.asarray(wfc, jnp.bfloat16)
    kp["bfc"] = jnp.asarray(bfc, jnp.float32)
    return kp


# ----------------------------------------------------------------------------
# Torch-layout parameter init + pure-XLA reference (for self-check)
# ----------------------------------------------------------------------------
def init_encoder_params(key, c, dim_z, h, w):
    """torch-layout parameters (Conv2d OIHW, Linear (out_features, in_features))."""
    ks = jax.random.split(key, 10)

    def conv_w(k, cout, cin):
        return jax.random.normal(k, (cout, cin, 4, 4), jnp.float32) / np.sqrt(cin * 16)

    feat = 4 * c * (h // 8) * (w // 8)   # LazyLinear in_features

    def lin_w(k, out_f, in_f):
        return jax.random.normal(k, (out_f, in_f), jnp.float32) / np.sqrt(in_f)

    return {
        "conv1_w": conv_w(ks[0], c, 1),
        "conv1_b": 0.05 * jax.random.normal(ks[1], (c,), jnp.float32),
        "conv2_w": conv_w(ks[2], 2 * c, c),
        "conv2_b": 0.05 * jax.random.normal(ks[3], (2 * c,), jnp.float32),
        "conv3_w": conv_w(ks[4], 4 * c, 2 * c),
        "conv3_b": 0.05 * jax.random.normal(ks[5], (4 * c,), jnp.float32),
        "fc_mu_w": lin_w(ks[6], dim_z, feat),
        "fc_mu_b": 0.05 * jax.random.normal(ks[7], (dim_z,), jnp.float32),
        "fc_logvar_w": lin_w(ks[8], dim_z, feat),
        "fc_logvar_b": 0.05 * jax.random.normal(ks[9], (dim_z,), jnp.float32),
    }


def encoder_reference(params, x_nchw):
    """Pure-JAX f32 replica of the torch module's forward."""
    def conv(x, w, b):
        y = jax.lax.conv_general_dilated(
            x, w, window_strides=(2, 2), padding=((1, 1), (1, 1)),
            dimension_numbers=("NCHW", "OIHW", "NCHW"))
        return jnp.maximum(y + b[None, :, None, None], 0.0)

    h = conv(x_nchw, params["conv1_w"], params["conv1_b"])
    h = conv(h, params["conv2_w"], params["conv2_b"])
    h = conv(h, params["conv3_w"], params["conv3_b"])
    flat = h.reshape(h.shape[0], -1)                      # torch x.view(N, -1)
    mu = flat @ params["fc_mu_w"].T + params["fc_mu_b"]
    logvar = flat @ params["fc_logvar_w"].T + params["fc_logvar_b"]
    return mu, logvar


if __name__ == "__main__":
    c, dim_z = 4, 8
    N, H, W = 2, 16, 16

    key = jax.random.PRNGKey(0)
    k_x, k_p = jax.random.split(key)
    x = jax.random.normal(k_x, (N, 1, H, W), jnp.float32)   # NCHW, in_channels=1
    params = init_encoder_params(k_p, c, dim_z, H, W)
    kparams = prepare_kernel_params(params, H, W, c, dim_z)

    mu, logvar = encoder_forward(kparams, x, dim_z)
    jax.block_until_ready((mu, logvar))

    assert mu.shape == (N, dim_z) and logvar.shape == (N, dim_z)
    assert mu.dtype == jnp.float32 and logvar.dtype == jnp.float32

    # numerics check vs the pure-XLA f32 reference (kernel uses bf16 operands)
    mu_ref, lv_ref = encoder_reference(params, x)
    assert jnp.allclose(mu, mu_ref, rtol=1e-1, atol=5e-2), \
        float(jnp.max(jnp.abs(mu - mu_ref)))
    assert jnp.allclose(logvar, lv_ref, rtol=1e-1, atol=5e-2), \
        float(jnp.max(jnp.abs(logvar - lv_ref)))

    print("KERNEL_OK")
</pallas_src>

<mosaic_0001>
module attributes {stable_mosaic.version = 11 : i64} {
  func.func @_encoder_kernel(%arg0: i32, %arg1: memref<1x16x16xf32, #tpu.memory_space<vmem>>, %arg2: memref<4x8x16xbf16, #tpu.memory_space<vmem>>, %arg3: memref<4x16x32xbf16, #tpu.memory_space<vmem>>, %arg4: memref<1x32xf32, #tpu.memory_space<vmem>>, %arg5: memref<4x4x8xbf16, #tpu.memory_space<vmem>>, %arg6: memref<4x32x32xbf16, #tpu.memory_space<vmem>>, %arg7: memref<1x32xf32, #tpu.memory_space<vmem>>, %arg8: memref<4x2x4xbf16, #tpu.memory_space<vmem>>, %arg9: memref<4x32x32xbf16, #tpu.memory_space<vmem>>, %arg10: memref<1x32xf32, #tpu.memory_space<vmem>>, %arg11: memref<2x32x128xbf16, #tpu.memory_space<vmem>>, %arg12: memref<1x128xf32, #tpu.memory_space<vmem>>, %arg13: memref<1x1x128xf32, #tpu.memory_space<vmem>>) attributes {dimension_semantics = [#tpu.dimension_semantics<parallel>], iteration_bounds = array<i64: 2>, scalar_prefetch = 0 : i64, scratch_operands = 0 : i64, tpu.core_type = #tpu.core_type<tc>, window_params = [{transform_indices = @transform_0, window_bounds = array<i64: 1, 16, 16>}, {pipeline_mode = #tpu.pipeline_mode<synchronous>, transform_indices = @transform_1, window_bounds = array<i64: 4, 8, 16>}, {pipeline_mode = #tpu.pipeline_mode<synchronous>, transform_indices = @transform_2, window_bounds = array<i64: 4, 16, 32>}, {pipeline_mode = #tpu.pipeline_mode<synchronous>, transform_indices = @transform_3, window_bounds = array<i64: 1, 32>}, {pipeline_mode = #tpu.pipeline_mode<synchronous>, transform_indices = @transform_4, window_bounds = array<i64: 4, 4, 8>}, {pipeline_mode = #tpu.pipeline_mode<synchronous>, transform_indices = @transform_5, window_bounds = array<i64: 4, 32, 32>}, {pipeline_mode = #tpu.pipeline_mode<synchronous>, transform_indices = @transform_6, window_bounds = array<i64: 1, 32>}, {pipeline_mode = #tpu.pipeline_mode<synchronous>, transform_indices = @transform_7, window_bounds = array<i64: 4, 2, 4>}, {pipeline_mode = #tpu.pipeline_mode<synchronous>, transform_indices = @transform_8, window_bounds = array<i64: 4, 32, 32>}, {pipeline_mode = #tpu.pipeline_mode<synchronous>, transform_indices = @transform_9, window_bounds = array<i64: 1, 32>}, {pipeline_mode = #tpu.pipeline_mode<synchronous>, transform_indices = @transform_10, window_bounds = array<i64: 2, 32, 128>}, {pipeline_mode = #tpu.pipeline_mode<synchronous>, transform_indices = @transform_11, window_bounds = array<i64: 1, 128>}, {transform_indices = @transform_12, window_bounds = array<i64: 1, 1, 128>}]} {
    %c0 = arith.constant 0 : index
    %c0_0 = arith.constant 0 : index
    %c0_1 = arith.constant 0 : index
    %0 = vector.load %arg1[%c0, %c0_0, %c0_1] : memref<1x16x16xf32, #tpu.memory_space<vmem>>, vector<1x16x16xf32>
    %1 = vector.shape_cast %0 : vector<1x16x16xf32> to vector<16x16xf32>
    %2 = arith.truncf %1 : vector<16x16xf32> to vector<16x16xbf16>
    %cst = arith.constant 0.000000e+00 : f32
    %3 = vector.broadcast %cst : f32 to vector<8x32xf32>
    %c0_2 = arith.constant 0 : index
    %c0_3 = arith.constant 0 : index
    %c0_4 = arith.constant 0 : index
    %4 = vector.load %arg2[%c0_2, %c0_3, %c0_4] : memref<4x8x16xbf16, #tpu.memory_space<vmem>>, vector<1x8x16xbf16>
    %5 = vector.shape_cast %4 : vector<1x8x16xbf16> to vector<8x16xbf16>
    %cst_5 = arith.constant dense<0.000000e+00> : vector<8x16xf32>
    %6 = tpu.matmul %5, %2, %cst_5 {dimension_numbers = #tpu.dot_dimension_numbers<[1], [0], [0], [1], [0, 0, 1, 1], [], []>} : vector<8x16xbf16>, vector<16x16xbf16>, vector<8x16xf32> -> vector<8x16xf32>
    %7 = arith.truncf %6 : vector<8x16xf32> to vector<8x16xbf16>
    %c0_6 = arith.constant 0 : index
    %c0_7 = arith.constant 0 : index
    %c0_8 = arith.constant 0 : index
    %8 = vector.load %arg3[%c0_6, %c0_7, %c0_8] : memref<4x16x32xbf16, #tpu.memory_space<vmem>>, vector<1x16x32xbf16>
    %9 = vector.shape_cast %8 : vector<1x16x32xbf16> to vector<16x32xbf16>
    %cst_9 = arith.constant dense<0.000000e+00> : vector<8x32xf32>
    %10 = tpu.matmul %7, %9, %cst_9 {dimension_numbers = #tpu.dot_dimension_numbers<[1], [0], [0], [1], [0, 0, 1, 1], [], []>} : vector<8x16xbf16>, vector<16x32xbf16>, vector<8x32xf32> -> vector<8x32xf32>
    %11 = arith.addf %3, %10 : vector<8x32xf32>
    %c1 = arith.constant 1 : index
    %c0_10 = arith.constant 0 : index
    %c0_11 = arith.constant 0 : index
    %12 = vector.load %arg2[%c1, %c0_10, %c0_11] : memref<4x8x16xbf16, #tpu.memory_space<vmem>>, vector<1x8x16xbf16>
    %13 = vector.shape_cast %12 : vector<1x8x16xbf16> to vector<8x16xbf16>
    %cst_12 = arith.constant dense<0.000000e+00> : vector<8x16xf32>
    %14 = tpu.matmul %13, %2, %cst_12 {dimension_numbers = #tpu.dot_dimension_numbers<[1], [0], [0], [1], [0, 0, 1, 1], [], []>} : vector<8x16xbf16>, vector<16x16xbf16>, vector<8x16xf32> -> vector<8x16xf32>
    %15 = arith.truncf %14 : vector<8x16xf32> to vector<8x16xbf16>
    %c1_13 = arith.constant 1 : index
    %c0_14 = arith.constant 0 : index
    %c0_15 = arith.constant 0 : index
    %16 = vector.load %arg3[%c1_13, %c0_14, %c0_15] : memref<4x16x32xbf16, #tpu.memory_space<vmem>>, vector<1x16x32xbf16>
    %17 = vector.shape_cast %16 : vector<1x16x32xbf16> to vector<16x32xbf16>
    %cst_16 = arith.constant dense<0.000000e+00> : vector<8x32xf32>
    %18 = tpu.matmul %15, %17, %cst_16 {dimension_numbers = #tpu.dot_dimension_numbers<[1], [0], [0], [1], [0, 0, 1, 1], [], []>} : vector<8x16xbf16>, vector<16x32xbf16>, vector<8x32xf32> -> vector<8x32xf32>
    %19 = arith.addf %11, %18 : vector<8x32xf32>
    %c2 = arith.constant 2 : index
    %c0_17 = arith.constant 0 : index
    %c0_18 = arith.constant 0 : index
    %20 = vector.load %arg2[%c2, %c0_17, %c0_18] : memref<4x8x16xbf16, #tpu.memory_space<vmem>>, vector<1x8x16xbf16>
    %21 = vector.shape_cast %20 : vector<1x8x16xbf16> to vector<8x16xbf16>
    %cst_19 = arith.constant dense<0.000000e+00> : vector<8x16xf32>
    %22 = tpu.matmul %21, %2, %cst_19 {dimension_numbers = #tpu.dot_dimension_numbers<[1], [0], [0], [1], [0, 0, 1, 1], [], []>} : vector<8x16xbf16>, vector<16x16xbf16>, vector<8x16xf32> -> vector<8x16xf32>
    %23 = arith.truncf %22 : vector<8x16xf32> to vector<8x16xbf16>
    %c2_20 = arith.constant 2 : index
    %c0_21 = arith.constant 0 : index
    %c0_22 = arith.constant 0 : index
    %24 = vector.load %arg3[%c2_20, %c0_21, %c0_22] : memref<4x16x32xbf16, #tpu.memory_space<vmem>>, vector<1x16x32xbf16>
    %25 = vector.shape_cast %24 : vector<1x16x32xbf16> to vector<16x32xbf16>
    %cst_23 = arith.constant dense<0.000000e+00> : vector<8x32xf32>
    %26 = tpu.matmul %23, %25, %cst_23 {dimension_numbers = #tpu.dot_dimension_numbers<[1], [0], [0], [1], [0, 0, 1, 1], [], []>} : vector<8x16xbf16>, vector<16x32xbf16>, vector<8x32xf32> -> vector<8x32xf32>
    %27 = arith.addf %19, %26 : vector<8x32xf32>
    %c3 = arith.constant 3 : index
    %c0_24 = arith.constant 0 : index
    %c0_25 = arith.constant 0 : index
    %28 = vector.load %arg2[%c3, %c0_24, %c0_25] : memref<4x8x16xbf16, #tpu.memory_space<vmem>>, vector<1x8x16xbf16>
    %29 = vector.shape_cast %28 : vector<1x8x16xbf16> to vector<8x16xbf16>
    %cst_26 = arith.constant dense<0.000000e+00> : vector<8x16xf32>
    %30 = tpu.matmul %29, %2, %cst_26 {dimension_numbers = #tpu.dot_dimension_numbers<[1], [0], [0], [1], [0, 0, 1, 1], [], []>} : vector<8x16xbf16>, vector<16x16xbf16>, vector<8x16xf32> -> vector<8x16xf32>
    %31 = arith.truncf %30 : vector<8x16xf32> to vector<8x16xbf16>
    %c3_27 = arith.constant 3 : index
    %c0_28 = arith.constant 0 : index
    %c0_29 = arith.constant 0 : index
    %32 = vector.load %arg3[%c3_27, %c0_28, %c0_29] : memref<4x16x32xbf16, #tpu.memory_space<vmem>>, vector<1x16x32xbf16>
    %33 = vector.shape_cast %32 : vector<1x16x32xbf16> to vector<16x32xbf16>
    %cst_30 = arith.constant dense<0.000000e+00> : vector<8x32xf32>
    %34 = tpu.matmul %31, %33, %cst_30 {dimension_numbers = #tpu.dot_dimension_numbers<[1], [0], [0], [1], [0, 0, 1, 1], [], []>} : vector<8x16xbf16>, vector<16x32xbf16>, vector<8x32xf32> -> vector<8x32xf32>
    %35 = arith.addf %27, %34 : vector<8x32xf32>
    %c0_31 = arith.constant 0 : index
    %c0_32 = arith.constant 0 : index
    %36 = vector.load %arg4[%c0_31, %c0_32] : memref<1x32xf32, #tpu.memory_space<vmem>>, vector<1x32xf32>
    %37 = vector.broadcast %36 : vector<1x32xf32> to vector<8x32xf32>
    %38 = arith.addf %35, %37 : vector<8x32xf32>
    %cst_33 = arith.constant 0.000000e+00 : f32
    %39 = vector.broadcast %cst_33 : f32 to vector<8x32xf32>
    %40 = arith.maximumf %38, %39 : vector<8x32xf32>
    %41 = arith.truncf %40 : vector<8x32xf32> to vector<8x32xbf16>
    %cst_34 = arith.constant 0.000000e+00 : f32
    %42 = vector.broadcast %cst_34 : f32 to vector<4x32xf32>
    %c0_35 = arith.constant 0 : index
    %c0_36 = arith.constant 0 : index
    %c0_37 = arith.constant 0 : index
    %43 = vector.load %arg5[%c0_35, %c0_36, %c0_37] : memref<4x4x8xbf16, #tpu.memory_space<vmem>>, vector<1x4x8xbf16>
    %44 = vector.shape_cast %43 : vector<1x4x8xbf16> to vector<4x8xbf16>
    %cst_38 = arith.constant dense<0.000000e+00> : vector<4x32xf32>
    %45 = tpu.matmul %44, %41, %cst_38 {dimension_numbers = #tpu.dot_dimension_numbers<[1], [0], [0], [1], [0, 0, 1, 1], [], []>} : vector<4x8xbf16>, vector<8x32xbf16>, vector<4x32xf32> -> vector<4x32xf32>
    %46 = arith.truncf %45 : vector<4x32xf32> to vector<4x32xbf16>
    %c0_39 = arith.constant 0 : index
    %c0_40 = arith.constant 0 : index
    %c0_41 = arith.constant 0 : index
    %47 = vector.load %arg6[%c0_39, %c0_40, %c0_41] : memref<4x32x32xbf16, #tpu.memory_space<vmem>>, vector<1x32x32xbf16>
    %48 = vector.shape_cast %47 : vector<1x32x32xbf16> to vector<32x32xbf16>
    %cst_42 = arith.constant dense<0.000000e+00> : vector<4x32xf32>
    %49 = tpu.matmul %46, %48, %cst_42 {dimension_numbers = #tpu.dot_dimension_numbers<[1], [0], [0], [1], [0, 0, 1, 1], [], []>} : vector<4x32xbf16>, vector<32x32xbf16>, vector<4x32xf32> -> vector<4x32xf32>
    %50 = arith.addf %42, %49 : vector<4x32xf32>
    %c1_43 = arith.constant 1 : index
    %c0_44 = arith.constant 0 : index
    %c0_45 = arith.constant 0 : index
    %51 = vector.load %arg5[%c1_43, %c0_44, %c0_45] : memref<4x4x8xbf16, #tpu.memory_space<vmem>>, vector<1x4x8xbf16>
    %52 = vector.shape_cast %51 : vector<1x4x8xbf16> to vector<4x8xbf16>
    %cst_46 = arith.constant dense<0.000000e+00> : vector<4x32xf32>
    %53 = tpu.matmul %52, %41, %cst_46 {dimension_numbers = #tpu.dot_dimension_numbers<[1], [0], [0], [1], [0, 0, 1, 1], [], []>} : vector<4x8xbf16>, vector<8x32xbf16>, vector<4x32xf32> -> vector<4x32xf32>
    %54 = arith.truncf %53 : vector<4x32xf32> to vector<4x32xbf16>
    %c1_47 = arith.constant 1 : index
    %c0_48 = arith.constant 0 : index
    %c0_49 = arith.constant 0 : index
    %55 = vector.load %arg6[%c1_47, %c0_48, %c0_49] : memref<4x32x32xbf16, #tpu.memory_space<vmem>>, vector<1x32x32xbf16>
    %56 = vector.shape_cast %55 : vector<1x32x32xbf16> to vector<32x32xbf16>
    %cst_50 = arith.constant dense<0.000000e+00> : vector<4x32xf32>
    %57 = tpu.matmul %54, %56, %cst_50 {dimension_numbers = #tpu.dot_dimension_numbers<[1], [0], [0], [1], [0, 0, 1, 1], [], []>} : vector<4x32xbf16>, vector<32x32xbf16>, vector<4x32xf32> -> vector<4x32xf32>
    %58 = arith.addf %50, %57 : vector<4x32xf32>
    %c2_51 = arith.constant 2 : index
    %c0_52 = arith.constant 0 : index
    %c0_53 = arith.constant 0 : index
    %59 = vector.load %arg5[%c2_51, %c0_52, %c0_53] : memref<4x4x8xbf16, #tpu.memory_space<vmem>>, vector<1x4x8xbf16>
    %60 = vector.shape_cast %59 : vector<1x4x8xbf16> to vector<4x8xbf16>
    %cst_54 = arith.constant dense<0.000000e+00> : vector<4x32xf32>
    %61 = tpu.matmul %60, %41, %cst_54 {dimension_numbers = #tpu.dot_dimension_numbers<[1], [0], [0], [1], [0, 0, 1, 1], [], []>} : vector<4x8xbf16>, vector<8x32xbf16>, vector<4x32xf32> -> vector<4x32xf32>
    %62 = arith.truncf %61 : vector<4x32xf32> to vector<4x32xbf16>
    %c2_55 = arith.constant 2 : index
    %c0_56 = arith.constant 0 : index
    %c0_57 = arith.constant 0 : index
    %63 = vector.load %arg6[%c2_55, %c0_56, %c0_57] : memref<4x32x32xbf16, #tpu.memory_space<vmem>>, vector<1x32x32xbf16>
    %64 = vector.shape_cast %63 : vector<1x32x32xbf16> to vector<32x32xbf16>
    %cst_58 = arith.constant dense<0.000000e+00> : vector<4x32xf32>
    %65 = tpu.matmul %62, %64, %cst_58 {dimension_numbers = #tpu.dot_dimension_numbers<[1], [0], [0], [1], [0, 0, 1, 1], [], []>} : vector<4x32xbf16>, vector<32x32xbf16>, vector<4x32xf32> -> vector<4x32xf32>
    %66 = arith.addf %58, %65 : vector<4x32xf32>
    %c3_59 = arith.constant 3 : index
    %c0_60 = arith.constant 0 : index
    %c0_61 = arith.constant 0 : index
    %67 = vector.load %arg5[%c3_59, %c0_60, %c0_61] : memref<4x4x8xbf16, #tpu.memory_space<vmem>>, vector<1x4x8xbf16>
    %68 = vector.shape_cast %67 : vector<1x4x8xbf16> to vector<4x8xbf16>
    %cst_62 = arith.constant dense<0.000000e+00> : vector<4x32xf32>
    %69 = tpu.matmul %68, %41, %cst_62 {dimension_numbers = #tpu.dot_dimension_numbers<[1], [0], [0], [1], [0, 0, 1, 1], [], []>} : vector<4x8xbf16>, vector<8x32xbf16>, vector<4x32xf32> -> vector<4x32xf32>
    %70 = arith.truncf %69 : vector<4x32xf32> to vector<4x32xbf16>
    %c3_63 = arith.constant 3 : index
    %c0_64 = arith.constant 0 : index
    %c0_65 = arith.constant 0 : index
    %71 = vector.load %arg6[%c3_63, %c0_64, %c0_65] : memref<4x32x32xbf16, #tpu.memory_space<vmem>>, vector<1x32x32xbf16>
    %72 = vector.shape_cast %71 : vector<1x32x32xbf16> to vector<32x32xbf16>
    %cst_66 = arith.constant dense<0.000000e+00> : vector<4x32xf32>
    %73 = tpu.matmul %70, %72, %cst_66 {dimension_numbers = #tpu.dot_dimension_numbers<[1], [0], [0], [1], [0, 0, 1, 1], [], []>} : vector<4x32xbf16>, vector<32x32xbf16>, vector<4x32xf32> -> vector<4x32xf32>
    %74 = arith.addf %66, %73 : vector<4x32xf32>
    %c0_67 = arith.constant 0 : index
    %c0_68 = arith.constant 0 : index
    %75 = vector.load %arg7[%c0_67, %c0_68] : memref<1x32xf32, #tpu.memory_space<vmem>>, vector<1x32xf32>
    %76 = vector.broadcast %75 : vector<1x32xf32> to vector<4x32xf32>
    %77 = arith.addf %74, %76 : vector<4x32xf32>
    %cst_69 = arith.constant 0.000000e+00 : f32
    %78 = vector.broadcast %cst_69 : f32 to vector<4x32xf32>
    %79 = arith.maximumf %77, %78 : vector<4x32xf32>
    %80 = arith.truncf %79 : vector<4x32xf32> to vector<4x32xbf16>
    %cst_70 = arith.constant 0.000000e+00 : f32
    %81 = vector.broadcast %cst_70 : f32 to vector<2x32xf32>
    %c0_71 = arith.constant 0 : index
    %c0_72 = arith.constant 0 : index
    %c0_73 = arith.constant 0 : index
    %82 = vector.load %arg8[%c0_71, %c0_72, %c0_73] : memref<4x2x4xbf16, #tpu.memory_space<vmem>>, vector<1x2x4xbf16>
    %83 = vector.shape_cast %82 : vector<1x2x4xbf16> to vector<2x4xbf16>
    %cst_74 = arith.constant dense<0.000000e+00> : vector<2x32xf32>
    %84 = tpu.matmul %83, %80, %cst_74 {dimension_numbers = #tpu.dot_dimension_numbers<[1], [0], [0], [1], [0, 0, 1, 1], [], []>} : vector<2x4xbf16>, vector<4x32xbf16>, vector<2x32xf32> -> vector<2x32xf32>
    %85 = arith.truncf %84 : vector<2x32xf32> to vector<2x32xbf16>
    %c0_75 = arith.constant 0 : index
    %c0_76 = arith.constant 0 : index
    %c0_77 = arith.constant 0 : index
    %86 = vector.load %arg9[%c0_75, %c0_76, %c0_77] : memref<4x32x32xbf16, #tpu.memory_space<vmem>>, vector<1x32x32xbf16>
    %87 = vector.shape_cast %86 : vector<1x32x32xbf16> to vector<32x32xbf16>
    %cst_78 = arith.constant dense<0.000000e+00> : vector<2x32xf32>
    %88 = tpu.matmul %85, %87, %cst_78 {dimension_numbers = #tpu.dot_dimension_numbers<[1], [0], [0], [1], [0, 0, 1, 1], [], []>} : vector<2x32xbf16>, vector<32x32xbf16>, vector<2x32xf32> -> vector<2x32xf32>
    %89 = arith.addf %81, %88 : vector<2x32xf32>
    %c1_79 = arith.constant 1 : index
    %c0_80 = arith.constant 0 : index
    %c0_81 = arith.constant 0 : index
    %90 = vector.load %arg8[%c1_79, %c0_80, %c0_81] : memref<4x2x4xbf16, #tpu.memory_space<vmem>>, vector<1x2x4xbf16>
    %91 = vector.shape_cast %90 : vector<1x2x4xbf16> to vector<2x4xbf16>
    %cst_82 = arith.constant dense<0.000000e+00> : vector<2x32xf32>
    %92 = tpu.matmul %91, %80, %cst_82 {dimension_numbers = #tpu.dot_dimension_numbers<[1], [0], [0], [1], [0, 0, 1, 1], [], []>} : vector<2x4xbf16>, vector<4x32xbf16>, vector<2x32xf32> -> vector<2x32xf32>
    %93 = arith.truncf %92 : vector<2x32xf32> to vector<2x32xbf16>
    %c1_83 = arith.constant 1 : index
    %c0_84 = arith.constant 0 : index
    %c0_85 = arith.constant 0 : index
    %94 = vector.load %arg9[%c1_83, %c0_84, %c0_85] : memref<4x32x32xbf16, #tpu.memory_space<vmem>>, vector<1x32x32xbf16>
    %95 = vector.shape_cast %94 : vector<1x32x32xbf16> to vector<32x32xbf16>
    %cst_86 = arith.constant dense<0.000000e+00> : vector<2x32xf32>
    %96 = tpu.matmul %93, %95, %cst_86 {dimension_numbers = #tpu.dot_dimension_numbers<[1], [0], [0], [1], [0, 0, 1, 1], [], []>} : vector<2x32xbf16>, vector<32x32xbf16>, vector<2x32xf32> -> vector<2x32xf32>
    %97 = arith.addf %89, %96 : vector<2x32xf32>
    %c2_87 = arith.constant 2 : index
    %c0_88 = arith.constant 0 : index
    %c0_89 = arith.constant 0 : index
    %98 = vector.load %arg8[%c2_87, %c0_88, %c0_89] : memref<4x2x4xbf16, #tpu.memory_space<vmem>>, vector<1x2x4xbf16>
    %99 = vector.shape_cast %98 : vector<1x2x4xbf16> to vector<2x4xbf16>
    %cst_90 = arith.constant dense<0.000000e+00> : vector<2x32xf32>
    %100 = tpu.matmul %99, %80, %cst_90 {dimension_numbers = #tpu.dot_dimension_numbers<[1], [0], [0], [1], [0, 0, 1, 1], [], []>} : vector<2x4xbf16>, vector<4x32xbf16>, vector<2x32xf32> -> vector<2x32xf32>
    %101 = arith.truncf %100 : vector<2x32xf32> to vector<2x32xbf16>
    %c2_91 = arith.constant 2 : index
    %c0_92 = arith.constant 0 : index
    %c0_93 = arith.constant 0 : index
    %102 = vector.load %arg9[%c2_91, %c0_92, %c0_93] : memref<4x32x32xbf16, #tpu.memory_space<vmem>>, vector<1x32x32xbf16>
    %103 = vector.shape_cast %102 : vector<1x32x32xbf16> to vector<32x32xbf16>
    %cst_94 = arith.constant dense<0.000000e+00> : vector<2x32xf32>
    %104 = tpu.matmul %101, %103, %cst_94 {dimension_numbers = #tpu.dot_dimension_numbers<[1], [0], [0], [1], [0, 0, 1, 1], [], []>} : vector<2x32xbf16>, vector<32x32xbf16>, vector<2x32xf32> -> vector<2x32xf32>
    %105 = arith.addf %97, %104 : vector<2x32xf32>
    %c3_95 = arith.constant 3 : index
    %c0_96 = arith.constant 0 : index
    %c0_97 = arith.constant 0 : index
    %106 = vector.load %arg8[%c3_95, %c0_96, %c0_97] : memref<4x2x4xbf16, #tpu.memory_space<vmem>>, vector<1x2x4xbf16>
    %107 = vector.shape_cast %106 : vector<1x2x4xbf16> to vector<2x4xbf16>
    %cst_98 = arith.constant dense<0.000000e+00> : vector<2x32xf32>
    %108 = tpu.matmul %107, %80, %cst_98 {dimension_numbers = #tpu.dot_dimension_numbers<[1], [0], [0], [1], [0, 0, 1, 1], [], []>} : vector<2x4xbf16>, vector<4x32xbf16>, vector<2x32xf32> -> vector<2x32xf32>
    %109 = arith.truncf %108 : vector<2x32xf32> to vector<2x32xbf16>
    %c3_99 = arith.constant 3 : index
    %c0_100 = arith.constant 0 : index
    %c0_101 = arith.constant 0 : index
    %110 = vector.load %arg9[%c3_99, %c0_100, %c0_101] : memref<4x32x32xbf16, #tpu.memory_space<vmem>>, vector<1x32x32xbf16>
    %111 = vector.shape_cast %110 : vector<1x32x32xbf16> to vector<32x32xbf16>
    %cst_102 = arith.constant dense<0.000000e+00> : vector<2x32xf32>
    %112 = tpu.matmul %109, %111, %cst_102 {dimension_numbers = #tpu.dot_dimension_numbers<[1], [0], [0], [1], [0, 0, 1, 1], [], []>} : vector<2x32xbf16>, vector<32x32xbf16>, vector<2x32xf32> -> vector<2x32xf32>
    %113 = arith.addf %105, %112 : vector<2x32xf32>
    %c0_103 = arith.constant 0 : index
    %c0_104 = arith.constant 0 : index
    %114 = vector.load %arg10[%c0_103, %c0_104] : memref<1x32xf32, #tpu.memory_space<vmem>>, vector<1x32xf32>
    %115 = vector.broadcast %114 : vector<1x32xf32> to vector<2x32xf32>
    %116 = arith.addf %113, %115 : vector<2x32xf32>
    %cst_105 = arith.constant 0.000000e+00 : f32
    %117 = vector.broadcast %cst_105 : f32 to vector<2x32xf32>
    %118 = arith.maximumf %116, %117 : vector<2x32xf32>
    %119 = arith.truncf %118 : vector<2x32xf32> to vector<2x32xbf16>
    %cst_106 = arith.constant 0.000000e+00 : f32
    %120 = vector.broadcast %cst_106 : f32 to vector<1x128xf32>
    %121 = vector.extract_strided_slice %119 {offsets = [0, 0], sizes = [1, 32], strides = [1, 1]} : vector<2x32xbf16> to vector<1x32xbf16>
    %c0_107 = arith.constant 0 : index
    %c0_108 = arith.constant 0 : index
    %c0_109 = arith.constant 0 : index
    %122 = vector.load %arg11[%c0_107, %c0_108, %c0_109] : memref<2x32x128xbf16, #tpu.memory_space<vmem>>, vector<1x32x128xbf16>
    %123 = vector.shape_cast %122 : vector<1x32x128xbf16> to vector<32x128xbf16>
    %cst_110 = arith.constant dense<0.000000e+00> : vector<1x128xf32>
    %124 = tpu.matmul %121, %123, %cst_110 {dimension_numbers = #tpu.dot_dimension_numbers<[1], [0], [0], [1], [0, 0, 1, 1], [], []>} : vector<1x32xbf16>, vector<32x128xbf16>, vector<1x128xf32> -> vector<1x128xf32>
    %125 = arith.addf %120, %124 : vector<1x128xf32>
    %126 = vector.extract_strided_slice %119 {offsets = [1, 0], sizes = [1, 32], strides = [1, 1]} : vector<2x32xbf16> to vector<1x32xbf16>
    %c1_111 = arith.constant 1 : index
    %c0_112 = arith.constant 0 : index
    %c0_113 = arith.constant 0 : index
    %127 = vector.load %arg11[%c1_111, %c0_112, %c0_113] : memref<2x32x128xbf16, #tpu.memory_space<vmem>>, vector<1x32x128xbf16>
    %128 = vector.shape_cast %127 : vector<1x32x128xbf16> to vector<32x128xbf16>
    %cst_114 = arith.constant dense<0.000000e+00> : vector<1x128xf32>
    %129 = tpu.matmul %126, %128, %cst_114 {dimension_numbers = #tpu.dot_dimension_numbers<[1], [0], [0], [1], [0, 0, 1, 1], [], []>} : vector<1x32xbf16>, vector<32x128xbf16>, vector<1x128xf32> -> vector<1x128xf32>
    %130 = arith.addf %125, %129 : vector<1x128xf32>
    %c0_115 = arith.constant 0 : index
    %c0_116 = arith.constant 0 : index
    %131 = vector.load %arg12[%c0_115, %c0_116] : memref<1x128xf32, #tpu.memory_space<vmem>>, vector<1x128xf32>
    %132 = arith.addf %130, %131 : vector<1x128xf32>
    %c0_117 = arith.constant 0 : index
    %c0_118 = arith.constant 0 : index
    %c0_119 = arith.constant 0 : index
    %133 = vector.load %arg13[%c0_117, %c0_118, %c0_119] : memref<1x1x128xf32, #tpu.memory_space<vmem>>, vector<1x1x128xf32>
    %134 = vector.shape_cast %133 : vector<1x1x128xf32> to vector<1x128xf32>
    %135 = vector.shape_cast %132 : vector<1x128xf32> to vector<1x1x128xf32>
    tpu.vector_store %arg13[%c0_117, %c0_118, %c0_119], %135 {strides = array<i32>} : memref<1x1x128xf32, #tpu.memory_space<vmem>>, vector<1x1x128xf32>,
    return
  }
  func.func @transform_0(%arg0: i32) -> (i32, i32, i32) {
    %c0_i32 = arith.constant 0 : i32
    %c0_i32_0 = arith.constant 0 : i32
    %c0_i32_1 = arith.constant 0 : i32
    return %arg0, %c0_i32, %c0_i32_0 : i32, i32, i32
  }
  func.func @transform_1(%arg0: i32) -> (i32, i32, i32) {
    %c0_i32 = arith.constant 0 : i32
    %c0_i32_0 = arith.constant 0 : i32
    %c0_i32_1 = arith.constant 0 : i32
    %c0_i32_2 = arith.constant 0 : i32
    return %c0_i32, %c0_i32_0, %c0_i32_1 : i32, i32, i32
  }
  func.func @transform_2(%arg0: i32) -> (i32, i32, i32) {
    %c0_i32 = arith.constant 0 : i32
    %c0_i32_0 = arith.constant 0 : i32
    %c0_i32_1 = arith.constant 0 : i32
    %c0_i32_2 = arith.constant 0 : i32
    return %c0_i32, %c0_i32_0, %c0_i32_1 : i32, i32, i32
  }
  func.func @transform_3(%arg0: i32) -> (i32, i32) {
    %c0_i32 = arith.constant 0 : i32
    %c0_i32_0 = arith.constant 0 : i32
    %c0_i32_1 = arith.constant 0 : i32
    return %c0_i32, %c0_i32_0 : i32, i32
  }
  func.func @transform_4(%arg0: i32) -> (i32, i32, i32) {
    %c0_i32 = arith.constant 0 : i32
    %c0_i32_0 = arith.constant 0 : i32
    %c0_i32_1 = arith.constant 0 : i32
    %c0_i32_2 = arith.constant 0 : i32
    return %c0_i32, %c0_i32_0, %c0_i32_1 : i32, i32, i32
  }
  func.func @transform_5(%arg0: i32) -> (i32, i32, i32) {
    %c0_i32 = arith.constant 0 : i32
    %c0_i32_0 = arith.constant 0 : i32
    %c0_i32_1 = arith.constant 0 : i32
    %c0_i32_2 = arith.constant 0 : i32
    return %c0_i32, %c0_i32_0, %c0_i32_1 : i32, i32, i32
  }
  func.func @transform_6(%arg0: i32) -> (i32, i32) {
    %c0_i32 = arith.constant 0 : i32
    %c0_i32_0 = arith.constant 0 : i32
    %c0_i32_1 = arith.constant 0 : i32
    return %c0_i32, %c0_i32_0 : i32, i32
  }
  func.func @transform_7(%arg0: i32) -> (i32, i32, i32) {
    %c0_i32 = arith.constant 0 : i32
    %c0_i32_0 = arith.constant 0 : i32
    %c0_i32_1 = arith.constant 0 : i32
    %c0_i32_2 = arith.constant 0 : i32
    return %c0_i32, %c0_i32_0, %c0_i32_1 : i32, i32, i32
  }
  func.func @transform_8(%arg0: i32) -> (i32, i32, i32) {
    %c0_i32 = arith.constant 0 : i32
    %c0_i32_0 = arith.constant 0 : i32
    %c0_i32_1 = arith.constant 0 : i32
    %c0_i32_2 = arith.constant 0 : i32
    return %c0_i32, %c0_i32_0, %c0_i32_1 : i32, i32, i32
  }
  func.func @transform_9(%arg0: i32) -> (i32, i32) {
    %c0_i32 = arith.constant 0 : i32
    %c0_i32_0 = arith.constant 0 : i32
    %c0_i32_1 = arith.constant 0 : i32
    return %c0_i32, %c0_i32_0 : i32, i32
  }
  func.func @transform_10(%arg0: i32) -> (i32, i32, i32) {
    %c0_i32 = arith.constant 0 : i32
    %c0_i32_0 = arith.constant 0 : i32
    %c0_i32_1 = arith.constant 0 : i32
    %c0_i32_2 = arith.constant 0 : i32
    return %c0_i32, %c0_i32_0, %c0_i32_1 : i32, i32, i32
  }
  func.func @transform_11(%arg0: i32) -> (i32, i32) {
    %c0_i32 = arith.constant 0 : i32
    %c0_i32_0 = arith.constant 0 : i32
    %c0_i32_1 = arith.constant 0 : i32
    return %c0_i32, %c0_i32_0 : i32, i32
  }
  func.func @transform_12(%arg0: i32) -> (i32, i32, i32) {
    %c0_i32 = arith.constant 0 : i32
    %c0_i32_0 = arith.constant 0 : i32
    %c0_i32_1 = arith.constant 0 : i32
    return %arg0, %c0_i32, %c0_i32_0 : i32, i32, i32
  }
}

</mosaic_0001>

<llo_original>
// kernel: tpu_custom_call.1
$region0: #{tpu_custom_call.1}
  #allocation0 [shape = 'u32[]', space=smem, size = 0x4, offset = 0x4, fixed_abs, tag = 'smem constant byte address 0x4 - core index']
  #allocation1 [shape = 'u32[144,128]{1,0:T(1,128)}', space=vmem, size = 0x12000, scoped, tag = 'internal scratch']
  %s0 = inlined_call_operand.hbm [shape: f32[2,16,16], index: 0, kind: input, shape index: {}]
  %s1 = inlined_call_operand.hbm [shape: bf16[4,8,16], index: 1, kind: input, shape index: {}]
  %s2 = inlined_call_operand.hbm [shape: bf16[4,16,32], index: 2, kind: input, shape index: {}]
  %s3 = inlined_call_operand.vmem [shape: f32[1,32], index: 3, kind: input, shape index: {}]
  %s4 = inlined_call_operand.hbm [shape: bf16[4,4,8], index: 4, kind: input, shape index: {}]
  %s5 = inlined_call_operand.hbm [shape: bf16[4,32,32], index: 5, kind: input, shape index: {}]
  %s6 = inlined_call_operand.hbm [shape: f32[1,32], index: 6, kind: input, shape index: {}]
  %s7 = inlined_call_operand.vmem [shape: bf16[4,2,4], index: 7, kind: input, shape index: {}]
  %s8 = inlined_call_operand.hbm [shape: bf16[4,32,32], index: 8, kind: input, shape index: {}]
  %s9 = inlined_call_operand.hbm [shape: f32[1,32], index: 9, kind: input, shape index: {}]
  %s10 = inlined_call_operand.vmem [shape: bf16[2,32,128], index: 10, kind: input, shape index: {}]
  %s11 = inlined_call_operand.vmem [shape: f32[1,128], index: 11, kind: input, shape index: {}]
  %s12 = inlined_call_operand.hbm [shape: f32[2,1,128], index: 12, kind: output, shape index: {}]
  %s13 = sld [smem:[#allocation0]]
  $region113: #{tpu_custom_call.1} parent=0
    _
  %s15 = ssub.s32 1, %s13
  %s16 = scalar_select 0, %s15, %s13
  $region1: #{tpu_custom_call.1} parent=0
    #allocation2 [shape = 'u8[16384]{0}', space=vmem, size = 0x4000, scoped, tag = 'input window, operand 0']
    #allocation3 [shape = 's32[2]{0}', space=sflag, size = 0x8, scoped, tag = 'scoped memory for tpu_custom_call.1']
    #allocation4 [shape = 's32[2]{0}', space=sflag, size = 0x8, scoped, tag = 'scoped memory for tpu_custom_call.1']
    #allocation5 [shape = 'u8[8192]{0}', space=vmem, size = 0x2000, scoped, tag = 'input window, operand 1, single buffered']
    #allocation6 [shape = 's32[1]{0}', space=sflag, size = 0x4, scoped, tag = 'scoped memory for tpu_custom_call.1']
    #allocation7 [shape = 'u8[16384]{0}', space=vmem, size = 0x4000, scoped, tag = 'input window, operand 2, single buffered']
    #allocation8 [shape = 'u8[4096]{0}', space=vmem, size = 0x1000, scoped, tag = 'input window, operand 4, single buffered']
    #allocation9 [shape = 's32[1]{0}', space=sflag, size = 0x4, scoped, tag = 'scoped memory for tpu_custom_call.1']
    #allocation10 [shape = 'u8[32768]{0}', space=vmem, size = 0x8000, scoped, tag = 'input window, operand 5, single buffered']
    #allocation11 [shape = 'u8[512]{0}', space=vmem, size = 0x400, scoped, tag = 'input window, operand 6, single buffered']
    #allocation12 [shape = 's32[1]{0}', space=sflag, size = 0x4, scoped, tag = 'scoped memory for tpu_custom_call.1']
    #allocation13 [shape = 'u8[32768]{0}', space=vmem, size = 0x8000, scoped, tag = 'input window, operand 8, single buffered']
    #allocation14 [shape = 'u8[512]{0}', space=vmem, size = 0x400, scoped, tag = 'input window, operand 9, single buffered']
    #allocation15 [shape = 's32[1]{0}', space=sflag, size = 0x4, scoped, tag = 'scoped memory for tpu_custom_call.1']
    #allocation16 [shape = 'u8[1024]{0}', space=vmem, size = 0x400, scoped, tag = 'output window, operand 0']
    %17 = vsyncpa [#allocation3], 0
    %s18 = scalar_lea.sflag [#allocation3], 1
    %19 = vsyncpa %s18, 0
    %20 = vsyncpa [#allocation6], 0
    %21 = vsyncpa [#allocation9], 0
    %22 = vsyncpa [#allocation12], 0
    %23 = vsyncpa [#allocation15], 0
    %24 = vsyncpa [#allocation4], 0
    %s25 = scalar_lea.sflag [#allocation4], 1
    %26 = vsyncpa %s25, 0
    loop: start=0, step=1, limit=4
    $region2: #{tpu_custom_call.1} parent=1 // loop_pre_header
      _
    $region3: #{tpu_custom_call.1} parent=1 // loop_header
      %s28 = sphi 0, %s32
      %p29 = scmp.ge.s32.totalorder %s28, 4
      %s38 = sphi 0, %s40
      %s41 = sphi 0, %s38
      %s42 = sphi 0, %s41
      %s58 = sphi 0, %s42
      %s62 = sphi 0, %s62
      %s64 = sphi 0, %s62
      %s65 = sphi 0, %s64
      %s79 = sphi 0, %s65
      %s83 = sphi 0, %s83
      %s85 = sphi 0, %s83
      %s86 = sphi 0, %s85
      %s100 = sphi 0, %s86
      %s104 = sphi 0, %s104
      %s106 = sphi 0, %s104
      %s107 = sphi 0, %s106
      %s121 = sphi 0, %s107
      %s125 = sphi 0, %s125
      %s127 = sphi 0, %s125
      %s128 = sphi 0, %s127
      %s142 = sphi 0, %s128
      %s146 = sphi 0, %s146
      %s148 = sphi 0, %s146
      %s149 = sphi 0, %s148
      %s163 = sphi 0, %s149
      %s167 = sphi 0, %s167
      %s169 = sphi 0, %s167
      %s170 = sphi 0, %s169
      %s184 = sphi 0, %s170
      %s188 = sphi 0, %s188
      %s190 = sphi 0, %s188
      %s191 = sphi 0, %s190
      %s205 = sphi 0, %s191
      %s209 = sphi 0, %s209
      %s211 = sphi 0, %s209
      %s212 = sphi 0, %s211
      %s226 = sphi 0, %s212
      %s230 = sphi 0, %s230
      %s232 = sphi 0, %s230
      %s233 = sphi 0, %s232
      %s247 = sphi 0, %s233
      %s251 = sphi 0, %s251
      %s253 = sphi 0, %s251
      %s254 = sphi 0, %s253
      %s268 = sphi 0, %s254
      %s272 = sphi 0, %s272
      %s274 = sphi 0, %s272
      %s275 = sphi 0, %s274
      %s289 = sphi 0, %s275
      %s295 = sphi 0, %s297
      %s298 = sphi 0, %s295
      %s299 = sphi 0, %s298
      %s315 = sphi 0, %s299
    $region4: #{tpu_custom_call.1} parent=1 // loop_header_branch
      %31 = sbr.rel (%p29) target = $region8
    $region5: #{tpu_custom_call.1} parent=1 // loop_body
      %s33 = ssub.s32 %s28, 1
      %s34 = ssub.s32 %s28, 2
      %s35 = sadd.s32 %s28, 1
      %s36 = ssub.s32 %s28, %s35
      %p37 = scmp.eq.s32.totalorder %s36, 0
      %s39 = sadd.s32 %s38, 1
      %s40 = scalar_select %p37, %s38, %s39
      %p43 = pneg %p37
      %p44 = scmp.eq.s32.totalorder %s28, 1
      %p45 = por %p43, %p44
      %p46 = scmp.ne.s32.totalorder %s38, %s41
      %p47 = scmp.eq.s32.totalorder %s28, 0
      %p48 = por %p46, %p47
      %p49 = scmp.ne.s32.totalorder %s38, %s41
      %p50 = scmp.eq.s32.totalorder %s33, 1
      %p51 = por %p49, %p50
      %p52 = scmp.ne.s32.totalorder %s41, %s42
      %p53 = scmp.eq.s32.totalorder %s33, 0
      %p54 = por %p52, %p53
      %p55 = scmp.ne.s32.totalorder %s41, %s42
      %p56 = scmp.eq.s32.totalorder %s34, 1
      %p57 = por %p55, %p56
      %p59 = scmp.ne.s32.totalorder %s42, %s58
      %p60 = scmp.eq.s32.totalorder %s34, 0
      %p61 = por %p59, %p60
      %s63 = sadd.s32 %s62, 1
      %p66 = scmp.eq.s32.totalorder %s28, 1
      %p67 = scmp.ne.s32.totalorder %s62, %s64
      %p68 = scmp.eq.s32.totalorder %s28, 0
      %p69 = por %p67, %p68
      %p70 = scmp.ne.s32.totalorder %s62, %s64
      %p71 = scmp.eq.s32.totalorder %s33, 1
      %p72 = por %p70, %p71
      %p73 = scmp.ne.s32.totalorder %s64, %s65
      %p74 = scmp.eq.s32.totalorder %s33, 0
      %p75 = por %p73, %p74
      %p76 = scmp.ne.s32.totalorder %s64, %s65
      %p77 = scmp.eq.s32.totalorder %s34, 1
      %p78 = por %p76, %p77
      %p80 = scmp.ne.s32.totalorder %s65, %s79
      %p81 = scmp.eq.s32.totalorder %s34, 0
      %p82 = por %p80, %p81
      %s84 = sadd.s32 %s83, 1
      %p87 = scmp.eq.s32.totalorder %s28, 1
      %p88 = scmp.ne.s32.totalorder %s83, %s85
      %p89 = scmp.eq.s32.totalorder %s28, 0
      %p90 = por %p88, %p89
      %p91 = scmp.ne.s32.totalorder %s83, %s85
      %p92 = scmp.eq.s32.totalorder %s33, 1
      %p93 = por %p91, %p92
      %p94 = scmp.ne.s32.totalorder %s85, %s86
      %p95 = scmp.eq.s32.totalorder %s33, 0
      %p96 = por %p94, %p95
      %p97 = scmp.ne.s32.totalorder %s85, %s86
      %p98 = scmp.eq.s32.totalorder %s34, 1
      %p99 = por %p97, %p98
      %p101 = scmp.ne.s32.totalorder %s86, %s100
      %p102 = scmp.eq.s32.totalorder %s34, 0
      %p103 = por %p101, %p102
      %s105 = sadd.s32 %s104, 1
      %p108 = scmp.eq.s32.totalorder %s28, 1
      %p109 = scmp.ne.s32.totalorder %s104, %s106
      %p110 = scmp.eq.s32.totalorder %s28, 0
      %p111 = por %p109, %p110
      %p112 = scmp.ne.s32.totalorder %s104, %s106
      %p113 = scmp.eq.s32.totalorder %s33, 1
      %p114 = por %p112, %p113
      %p115 = scmp.ne.s32.totalorder %s106, %s107
      %p116 = scmp.eq.s32.totalorder %s33, 0
      %p117 = por %p115, %p116
      %p118 = scmp.ne.s32.totalorder %s106, %s107
      %p119 = scmp.eq.s32.totalorder %s34, 1
      %p120 = por %p118, %p119
      %p122 = scmp.ne.s32.totalorder %s107, %s121
      %p123 = scmp.eq.s32.totalorder %s34, 0
      %p124 = por %p122, %p123
      %s126 = sadd.s32 %s125, 1
      %p129 = scmp.eq.s32.totalorder %s28, 1
      %p130 = scmp.ne.s32.totalorder %s125, %s127
      %p131 = scmp.eq.s32.totalorder %s28, 0
      %p132 = por %p130, %p131
      %p133 = scmp.ne.s32.totalorder %s125, %s127
      %p134 = scmp.eq.s32.totalorder %s33, 1
      %p135 = por %p133, %p134
      %p136 = scmp.ne.s32.totalorder %s127, %s128
      %p137 = scmp.eq.s32.totalorder %s33, 0
      %p138 = por %p136, %p137
      %p139 = scmp.ne.s32.totalorder %s127, %s128
      %p140 = scmp.eq.s32.totalorder %s34, 1
      %p141 = por %p139, %p140
      %p143 = scmp.ne.s32.totalorder %s128, %s142
      %p144 = scmp.eq.s32.totalorder %s34, 0
      %p145 = por %p143, %p144
      %s147 = sadd.s32 %s146, 1
      %p150 = scmp.eq.s32.totalorder %s28, 1
      %p151 = scmp.ne.s32.totalorder %s146, %s148
      %p152 = scmp.eq.s32.totalorder %s28, 0
      %p153 = por %p151, %p152
      %p154 = scmp.ne.s32.totalorder %s146, %s148
      %p155 = scmp.eq.s32.totalorder %s33, 1
      %p156 = por %p154, %p155
      %p157 = scmp.ne.s32.totalorder %s148, %s149
      %p158 = scmp.eq.s32.totalorder %s33, 0
      %p159 = por %p157, %p158
      %p160 = scmp.ne.s32.totalorder %s148, %s149
      %p161 = scmp.eq.s32.totalorder %s34, 1
      %p162 = por %p160, %p161
      %p164 = scmp.ne.s32.totalorder %s149, %s163
      %p165 = scmp.eq.s32.totalorder %s34, 0
      %p166 = por %p164, %p165
      %s168 = sadd.s32 %s167, 1
      %p171 = scmp.eq.s32.totalorder %s28, 1
      %p172 = scmp.ne.s32.totalorder %s167, %s169
      %p173 = scmp.eq.s32.totalorder %s28, 0
      %p174 = por %p172, %p173
      %p175 = scmp.ne.s32.totalorder %s167, %s169
      %p176 = scmp.eq.s32.totalorder %s33, 1
      %p177 = por %p175, %p176
      %p178 = scmp.ne.s32.totalorder %s169, %s170
      %p179 = scmp.eq.s32.totalorder %s33, 0
      %p180 = por %p178, %p179
      %p181 = scmp.ne.s32.totalorder %s169, %s170
      %p182 = scmp.eq.s32.totalorder %s34, 1
      %p183 = por %p181, %p182
      %p185 = scmp.ne.s32.totalorder %s170, %s184
      %p186 = scmp.eq.s32.totalorder %s34, 0
      %p187 = por %p185, %p186
      %s189 = sadd.s32 %s188, 1
      %p192 = scmp.eq.s32.totalorder %s28, 1
      %p193 = scmp.ne.s32.totalorder %s188, %s190
      %p194 = scmp.eq.s32.totalorder %s28, 0
      %p195 = por %p193, %p194
      %p196 = scmp.ne.s32.totalorder %s188, %s190
      %p197 = scmp.eq.s32.totalorder %s33, 1
      %p198 = por %p196, %p197
      %p199 = scmp.ne.s32.totalorder %s190, %s191
      %p200 = scmp.eq.s32.totalorder %s33, 0
      %p201 = por %p199, %p200
      %p202 = scmp.ne.s32.totalorder %s190, %s191
      %p203 = scmp.eq.s32.totalorder %s34, 1
      %p204 = por %p202, %p203
      %p206 = scmp.ne.s32.totalorder %s191, %s205
      %p207 = scmp.eq.s32.totalorder %s34, 0
      %p208 = por %p206, %p207
      %s210 = sadd.s32 %s209, 1
      %p213 = scmp.eq.s32.totalorder %s28, 1
      %p214 = scmp.ne.s32.totalorder %s209, %s211
      %p215 = scmp.eq.s32.totalorder %s28, 0
      %p216 = por %p214, %p215
      %p217 = scmp.ne.s32.totalorder %s209, %s211
      %p218 = scmp.eq.s32.totalorder %s33, 1
      %p219 = por %p217, %p218
      %p220 = scmp.ne.s32.totalorder %s211, %s212
      %p221 = scmp.eq.s32.totalorder %s33, 0
      %p222 = por %p220, %p221
      %p223 = scmp.ne.s32.totalorder %s211, %s212
      %p224 = scmp.eq.s32.totalorder %s34, 1
      %p225 = por %p223, %p224
      %p227 = scmp.ne.s32.totalorder %s212, %s226
      %p228 = scmp.eq.s32.totalorder %s34, 0
      %p229 = por %p227, %p228
      %s231 = sadd.s32 %s230, 1
      %p234 = scmp.eq.s32.totalorder %s28, 1
      %p235 = scmp.ne.s32.totalorder %s230, %s232
      %p236 = scmp.eq.s32.totalorder %s28, 0
      %p237 = por %p235, %p236
      %p238 = scmp.ne.s32.totalorder %s230, %s232
      %p239 = scmp.eq.s32.totalorder %s33, 1
      %p240 = por %p238, %p239
      %p241 = scmp.ne.s32.totalorder %s232, %s233
      %p242 = scmp.eq.s32.totalorder %s33, 0
      %p243 = por %p241, %p242
      %p244 = scmp.ne.s32.totalorder %s232, %s233
      %p245 = scmp.eq.s32.totalorder %s34, 1
      %p246 = por %p244, %p245
      %p248 = scmp.ne.s32.totalorder %s233, %s247
      %p249 = scmp.eq.s32.totalorder %s34, 0
      %p250 = por %p248, %p249
      %s252 = sadd.s32 %s251, 1
      %p255 = scmp.eq.s32.totalorder %s28, 1
      %p256 = scmp.ne.s32.totalorder %s251, %s253
      %p257 = scmp.eq.s32.totalorder %s28, 0
      %p258 = por %p256, %p257
      %p259 = scmp.ne.s32.totalorder %s251, %s253
      %p260 = scmp.eq.s32.totalorder %s33, 1
      %p261 = por %p259, %p260
      %p262 = scmp.ne.s32.totalorder %s253, %s254
      %p263 = scmp.eq.s32.totalorder %s33, 0
      %p264 = por %p262, %p263
      %p265 = scmp.ne.s32.totalorder %s253, %s254
      %p266 = scmp.eq.s32.totalorder %s34, 1
      %p267 = por %p265, %p266
      %p269 = scmp.ne.s32.totalorder %s254, %s268
      %p270 = scmp.eq.s32.totalorder %s34, 0
      %p271 = por %p269, %p270
      %s273 = sadd.s32 %s272, 1
      %p276 = scmp.eq.s32.totalorder %s28, 1
      %p277 = scmp.ne.s32.totalorder %s272, %s274
      %p278 = scmp.eq.s32.totalorder %s28, 0
      %p279 = por %p277, %p278
      %p280 = scmp.ne.s32.totalorder %s272, %s274
      %p281 = scmp.eq.s32.totalorder %s33, 1
      %p282 = por %p280, %p281
      %p283 = scmp.ne.s32.totalorder %s274, %s275
      %p284 = scmp.eq.s32.totalorder %s33, 0
      %p285 = por %p283, %p284
      %p286 = scmp.ne.s32.totalorder %s274, %s275
      %p287 = scmp.eq.s32.totalorder %s34, 1
      %p288 = por %p286, %p287
      %p290 = scmp.ne.s32.totalorder %s275, %s289
      %p291 = scmp.eq.s32.totalorder %s34, 0
      %p292 = por %p290, %p291
      %s293 = ssub.s32 %s28, %s35
      %p294 = scmp.eq.s32.totalorder %s293, 0
      %s296 = sadd.s32 %s295, 1
      %s297 = scalar_select %p294, %s295, %s296
      %p300 = pneg %p294
      %p301 = scmp.eq.s32.totalorder %s28, 1
      %p302 = por %p300, %p301
      %p303 = scmp.ne.s32.totalorder %s295, %s298
      %p304 = scmp.eq.s32.totalorder %s28, 0
      %p305 = por %p303, %p304
      %p306 = scmp.ne.s32.totalorder %s295, %s298
      %p307 = scmp.eq.s32.totalorder %s33, 1
      %p308 = por %p306, %p307
      %p309 = scmp.ne.s32.totalorder %s298, %s299
      %p310 = scmp.eq.s32.totalorder %s33, 0
      %p311 = por %p309, %p310
      %p312 = scmp.ne.s32.totalorder %s298, %s299
      %p313 = scmp.eq.s32.totalorder %s34, 1
      %p314 = por %p312, %p313
      %p316 = scmp.ne.s32.totalorder %s299, %s315
      %p317 = scmp.eq.s32.totalorder %s34, 0
      %p318 = por %p316, %p317
      %p319 = scmp.le.s32.totalorder 1, %s28
      %p320 = scmp.lt.s32.totalorder %s28, 3
      %p321 = pnand %p319, %p320
      %p322 = pneg %p321
      // Predicated region
      $region9: #{tpu_custom_call.1} parent=5 // pred_check
        _
      $region10: #{tpu_custom_call.1} parent=5 // pred_check_branch
        %324 = sbr.rel (%p321) target = $region12
      $region11: #{tpu_custom_call.1} parent=5 // pred_region
        %s325 = ssub.s32 %s28, 1
        // Predicated region
        $region13: #{tpu_custom_call.1} parent=11 // pred_check
          %p326 = pneg %p75
        $region14: #{tpu_custom_call.1} parent=11 // pred_check_branch
          %328 = sbr.rel (%p326) target = $region16
        $region15: #{tpu_custom_call.1} parent=11 // pred_region
          %s330 = ssub.s32 256, 256
          %331 = vsyncadd [#allocation6], %s330
          %s332 = sshll.u32 [#allocation5], 4
          %s333 = int_to_ptr.vmem [resolvable:$true] %s332
          %338 = dma.hbm_to_vmem [thread:$0]  %s1, 256, %s333, [#allocation6], 64, 64, 4
        $region16: #{tpu_custom_call.1} parent=11 // pred_fallthru
          _
        // Predicated region
        $region17: #{tpu_custom_call.1} parent=11 // pred_check
          %p339 = pneg %p96
        $region18: #{tpu_custom_call.1} parent=11 // pred_check_branch
          %341 = sbr.rel (%p339) target = $region20
        $region19: #{tpu_custom_call.1} parent=11 // pred_region
          %s343 = ssub.s32 512, 512
          %344 = vsyncadd [#allocation6], %s343
          %s345 = sshll.u32 [#allocation7], 4
          %s346 = int_to_ptr.vmem [resolvable:$true] %s345
          %351 = dma.hbm_to_vmem [thread:$0]  %s2, 512, %s346, [#allocation6], 64, 64, 4
        $region20: #{tpu_custom_call.1} parent=11 // pred_fallthru
          _
        // Predicated region
        $region21: #{tpu_custom_call.1} parent=11 // pred_check
          %p352 = pneg %p117
        $region22: #{tpu_custom_call.1} parent=11 // pred_check_branch
          %354 = sbr.rel (%p352) target = $region24
        $region23: #{tpu_custom_call.1} parent=11 // pred_region
          _
        $region24: #{tpu_custom_call.1} parent=11 // pred_fallthru
          _
        // Predicated region
        $region25: #{tpu_custom_call.1} parent=11 // pred_check
          %p355 = pneg %p138
        $region26: #{tpu_custom_call.1} parent=11 // pred_check_branch
          %357 = sbr.rel (%p355) target = $region28
        $region27: #{tpu_custom_call.1} parent=11 // pred_region
          %s359 = ssub.s32 128, 128
          %360 = vsyncadd [#allocation9], %s359
          %s361 = sshll.u32 [#allocation8], 4
          %s362 = int_to_ptr.vmem [resolvable:$true] %s361
          %367 = dma.hbm_to_vmem [thread:$0]  %s4, 128, %s362, [#allocation9], 32, 32, 2
        $region28: #{tpu_custom_call.1} parent=11 // pred_fallthru
          _
        // Predicated region
        $region29: #{tpu_custom_call.1} parent=11 // pred_check
          %p368 = pneg %p159
        $region30: #{tpu_custom_call.1} parent=11 // pred_check_branch
          %370 = sbr.rel (%p368) target = $region32
        $region31: #{tpu_custom_call.1} parent=11 // pred_region
          %s372 = ssub.s32 1024, 1024
          %373 = vsyncadd [#allocation9], %s372
          %s374 = sshll.u32 [#allocation10], 4
          %s375 = int_to_ptr.vmem [resolvable:$true] %s374
          %380 = dma.hbm_to_vmem [thread:$0]  %s5, 1024, %s375, [#allocation9], 64, 64, 4
        $region32: #{tpu_custom_call.1} parent=11 // pred_fallthru
          _
        // Predicated region
        $region33: #{tpu_custom_call.1} parent=11 // pred_check
          %p381 = pneg %p180
        $region34: #{tpu_custom_call.1} parent=11 // pred_check_branch
          %383 = sbr.rel (%p381) target = $region36
        $region35: #{tpu_custom_call.1} parent=11 // pred_region
          %s385 = ssub.s32 16, 16
          %386 = vsyncadd [#allocation12], %s385
          %s388 = sshll.u32 [#allocation11], 4
          %s389 = int_to_ptr.vmem [resolvable:$true] %s388
          %391 = dma.hbm_to_vmem [thread:$0]  %s6, 16, %s389, [#allocation12]
        $region36: #{tpu_custom_call.1} parent=11 // pred_fallthru
          _
        // Predicated region
        $region37: #{tpu_custom_call.1} parent=11 // pred_check
          %p392 = pneg %p201
        $region38: #{tpu_custom_call.1} parent=11 // pred_check_branch
          %394 = sbr.rel (%p392) target = $region40
        $region39: #{tpu_custom_call.1} parent=11 // pred_region
          _
        $region40: #{tpu_custom_call.1} parent=11 // pred_fallthru
          _
        // Predicated region
        $region41: #{tpu_custom_call.1} parent=11 // pred_check
          %p395 = pneg %p222
        $region42: #{tpu_custom_call.1} parent=11 // pred_check_branch
          %397 = sbr.rel (%p395) target = $region44
        $region43: #{tpu_custom_call.1} parent=11 // pred_region
          %s399 = ssub.s32 1024, 1024
          %400 = vsyncadd [#allocation12], %s399
          %s401 = sshll.u32 [#allocation13], 4
          %s402 = int_to_ptr.vmem [resolvable:$true] %s401
          %407 = dma.hbm_to_vmem [thread:$0]  %s8, 1024, %s402, [#allocation12], 64, 64, 4
        $region44: #{tpu_custom_call.1} parent=11 // pred_fallthru
          _
        // Predicated region
        $region45: #{tpu_custom_call.1} parent=11 // pred_check
          %p408 = pneg %p243
        $region46: #{tpu_custom_call.1} parent=11 // pred_check_branch
          %410 = sbr.rel (%p408) target = $region48
        $region47: #{tpu_custom_call.1} parent=11 // pred_region
          %s412 = ssub.s32 16, 16
          %413 = vsyncadd [#allocation15], %s412
          %s415 = sshll.u32 [#allocation14], 4
          %s416 = int_to_ptr.vmem [resolvable:$true] %s415
          %418 = dma.hbm_to_vmem [thread:$0]  %s9, 16, %s416, [#allocation15]
        $region48: #{tpu_custom_call.1} parent=11 // pred_fallthru
          _
        // Predicated region
        $region49: #{tpu_custom_call.1} parent=11 // pred_check
          %p419 = pneg %p264
        $region50: #{tpu_custom_call.1} parent=11 // pred_check_branch
          %421 = sbr.rel (%p419) target = $region52
        $region51: #{tpu_custom_call.1} parent=11 // pred_region
          _
        $region52: #{tpu_custom_call.1} parent=11 // pred_fallthru
          _
        // Predicated region
        $region53: #{tpu_custom_call.1} parent=11 // pred_check
          %p422 = pneg %p285
        $region54: #{tpu_custom_call.1} parent=11 // pred_check_branch
          %424 = sbr.rel (%p422) target = $region56
        $region55: #{tpu_custom_call.1} parent=11 // pred_region
          _
        $region56: #{tpu_custom_call.1} parent=11 // pred_fallthru
          _
      $region12: #{tpu_custom_call.1} parent=5 // pred_fallthru
        _
      %p425 = scmp.lt.s32.totalorder %s28, 2
      // Predicated region
      $region57: #{tpu_custom_call.1} parent=5 // pred_check
        %p426 = pneg %p425
      $region58: #{tpu_custom_call.1} parent=5 // pred_check_branch
        %428 = sbr.rel (%p426) target = $region60
      $region59: #{tpu_custom_call.1} parent=5 // pred_region
        // Predicated region
        $region61: #{tpu_custom_call.1} parent=59 // pred_check
          %p429 = pneg %p48
        $region62: #{tpu_custom_call.1} parent=59 // pred_check_branch
          %431 = sbr.rel (%p429) target = $region64
        $region63: #{tpu_custom_call.1} parent=59 // pred_region
          %s432 = sand.u32 %s38, 1
          %s433 = scalar_lea.sflag [#allocation3], %s432
          %s434 = sand.u32 %s38, 1
          %s435 = smul.addr %s434, 16
          %s436 = scalar_lea.vmem [#allocation2], %s435
          %s438 = ssub.s32 256, 256
          %439 = vsyncadd %s433, %s438
          %s440 = smul.addr %s28, 2
          %s441 = smul.addr %s440, 128
          %s442 = scalar_lea.hbm %s0, %s441
          %s443 = sshll.u32 %s436, 4
          %s444 = int_to_ptr.vmem [resolvable:$true] %s443
          %449 = dma.hbm_to_vmem [thread:$0]  %s442, 256, %s444, %s433, 128, 128, 8
        $region64: #{tpu_custom_call.1} parent=59 // pred_fallthru
          _
      $region60: #{tpu_custom_call.1} parent=5 // pred_fallthru
        _
      %p450 = scmp.le.s32.totalorder 1, %s28
      %p451 = scmp.lt.s32.totalorder %s28, 3
      %p452 = pnand %p450, %p451
      %p453 = pneg %p452
      // Predicated region
      $region65: #{tpu_custom_call.1} parent=5 // pred_check
        _
      $region66: #{tpu_custom_call.1} parent=5 // pred_check_branch
        %455 = sbr.rel (%p452) target = $region68
      $region67: #{tpu_custom_call.1} parent=5 // pred_region
        %s456 = ssub.s32 %s28, 1
        %s457 = sand.u32 %s41, 1
        %s458 = scalar_lea.sflag [#allocation3], %s457
        %s459 = sand.u32 %s41, 1
        %s460 = smul.addr %s459, 16
        %s461 = scalar_lea.vmem [#allocation2], %s460
        // Predicated region
        $region69: #{tpu_custom_call.1} parent=67 // pred_check
          %p462 = pneg %p54
        $region70: #{tpu_custom_call.1} parent=67 // pred_check_branch
          %464 = sbr.rel (%p462) target = $region72
        $region71: #{tpu_custom_call.1} parent=67 // pred_region
          %465 = dma.done %s458, 256
        $region72: #{tpu_custom_call.1} parent=67 // pred_fallthru
          _
        // Predicated region
        $region73: #{tpu_custom_call.1} parent=67 // pred_check
          %p466 = pneg %p75
        $region74: #{tpu_custom_call.1} parent=67 // pred_check_branch
          %468 = sbr.rel (%p466) target = $region76
        $region75: #{tpu_custom_call.1} parent=67 // pred_region
          %469 = dma.done [#allocation6], 256
        $region76: #{tpu_custom_call.1} parent=67 // pred_fallthru
          _
        // Predicated region
        $region77: #{tpu_custom_call.1} parent=67 // pred_check
          %p470 = pneg %p96
        $region78: #{tpu_custom_call.1} parent=67 // pred_check_branch
          %472 = sbr.rel (%p470) target = $region80
        $region79: #{tpu_custom_call.1} parent=67 // pred_region
          %473 = dma.done [#allocation6], 512
        $region80: #{tpu_custom_call.1} parent=67 // pred_fallthru
          _
        // Predicated region
        $region81: #{tpu_custom_call.1} parent=67 // pred_check
          %p474 = pneg %p138
        $region82: #{tpu_custom_call.1} parent=67 // pred_check_branch
          %476 = sbr.rel (%p474) target = $region84
        $region83: #{tpu_custom_call.1} parent=67 // pred_region
          %477 = dma.done [#allocation9], 128
        $region84: #{tpu_custom_call.1} parent=67 // pred_fallthru
          _
        // Predicated region
        $region85: #{tpu_custom_call.1} parent=67 // pred_check
          %p478 = pneg %p159
        $region86: #{tpu_custom_call.1} parent=67 // pred_check_branch
          %480 = sbr.rel (%p478) target = $region88
        $region87: #{tpu_custom_call.1} parent=67 // pred_region
          %481 = dma.done [#allocation9], 1024
        $region88: #{tpu_custom_call.1} parent=67 // pred_fallthru
          _
        // Predicated region
        $region89: #{tpu_custom_call.1} parent=67 // pred_check
          %p482 = pneg %p180
        $region90: #{tpu_custom_call.1} parent=67 // pred_check_branch
          %484 = sbr.rel (%p482) target = $region92
        $region91: #{tpu_custom_call.1} parent=67 // pred_region
          %485 = dma.done [#allocation12], 16
        $region92: #{tpu_custom_call.1} parent=67 // pred_fallthru
          _
        // Predicated region
        $region93: #{tpu_custom_call.1} parent=67 // pred_check
          %p486 = pneg %p222
        $region94: #{tpu_custom_call.1} parent=67 // pred_check_branch
          %488 = sbr.rel (%p486) target = $region96
        $region95: #{tpu_custom_call.1} parent=67 // pred_region
          %489 = dma.done [#allocation12], 1024
        $region96: #{tpu_custom_call.1} parent=67 // pred_fallthru
          _
        // Predicated region
        $region97: #{tpu_custom_call.1} parent=67 // pred_check
          %p490 = pneg %p243
        $region98: #{tpu_custom_call.1} parent=67 // pred_check_branch
          %492 = sbr.rel (%p490) target = $region100
        $region99: #{tpu_custom_call.1} parent=67 // pred_region
          %493 = dma.done [#allocation15], 16
        $region100: #{tpu_custom_call.1} parent=67 // pred_fallthru
          _
        %s494 = sand.u32 %s41, 1
        %s495 = scalar_lea.sflag [#allocation3], %s494
        %s496 = sand.u32 %s41, 1
        %s497 = smul.addr %s496, 16
        %s498 = scalar_lea.vmem [#allocation2], %s497
        %p499 = pneg %p54
        %p500 = pneg %p51
        %p501 = pneg %p75
        %p502 = pneg %p72
        %p503 = pneg %p96
        %p504 = pneg %p93
        %p505 = pneg %p117
        %p506 = pneg %p114
        %p507 = pneg %p138
        %p508 = pneg %p135
        %p509 = pneg %p159
        %p510 = pneg %p156
        %p511 = pneg %p180
        %p512 = pneg %p177
        %p513 = pneg %p201
        %p514 = pneg %p198
        %p515 = pneg %p222
        %p516 = pneg %p219
        %p517 = pneg %p243
        %p518 = pneg %p240
        %p519 = pneg %p264
        %p520 = pneg %p261
        %p521 = pneg %p285
        %p522 = pneg %p282
        %p523 = pneg %p311
        %p524 = pneg %p308
        %s525 = sand.u32 %s298, 1
        %s526 = scalar_lea.sflag [#allocation4], %s525
        %s527 = sand.u32 %s298, 1
        %s528 = scalar_lea.vmem [#allocation16], %s527
        %v530 = vld [vmem:[%s461] sm:$0xff]
        %v531 = vld [vmem:[%s461 + $0x8] sm:$0xff]
        %v532 = vpack.c.bf16 %v531, %v530
        %v533 = vld [vmem:[#allocation5] sm:$0xf]
        %vm534 = vcmask 130048
        %v536 = vsel %vm534, %v533, 0
        %538 = vmatprep.subr.bf16.mxu0 0
        %539 = vmatpush1.bf16.msra.mxu0 %v532
        %540 = vmatprep.subr.bf16.mxu0 0
        %541 = vmatpush1.bf16.msra.mxu0 0
        %542 = vmatprep.subr.bf16.mxu0 0
        %543 = vmatpush1.bf16.msra.mxu0 0
        %544 = vmatprep.subr.bf16.mxu0 0
        %545 = vmatpush1.bf16.msra.mxu0 0
        %546 = vmatprep.subr.bf16.mxu0 0
        %547 = vmatpush1.bf16.msra.mxu0 0
        %548 = vmatprep.subr.bf16.mxu0 0
        %549 = vmatpush1.bf16.msra.mxu0 0
        %550 = vmatprep.subr.bf16.mxu0 0
        %551 = vmatpush1.bf16.msra.mxu0 0
        %552 = vmatprep.subr.bf16.mxu0 0
        %553 = vmatpush1.bf16.msra.mxu0 0
        %554 = vmatprep.subr.bf16.mxu0 0
        %555 = vmatpush1.bf16.msra.mxu0 0
        %556 = vmatprep.subr.bf16.mxu0 0
        %557 = vmatpush1.bf16.msra.mxu0 0
        %558 = vmatprep.subr.bf16.mxu0 0
        %559 = vmatpush1.bf16.msra.mxu0 0
        %560 = vmatprep.subr.bf16.mxu0 0
        %561 = vmatpush1.bf16.msra.mxu0 0
        %562 = vmatprep.subr.bf16.mxu0 0
        %563 = vmatpush1.bf16.msra.mxu0 0
        %564 = vmatprep.subr.bf16.mxu0 0
        %565 = vmatpush1.bf16.msra.mxu0 0
        %566 = vmatprep.subr.bf16.mxu0 0
        %567 = vmatpush1.bf16.msra.mxu0 0
        %568 = vmatprep.subr.bf16.mxu0 0
        %569 = vmatpush1.bf16.msra.mxu0 0
        %570 = vmatprep.mubr.bf16.mxu0 0
        %571 = vmatmul.mubr.bf16.gmra.mrb[0].mxu0 %v536
        %v572 = vpop.f32.mrb[0].mxu0
        %v573 = vadd.f32 0.0, %v572
        %v574 = vpop.f32.mrb[0].mxu0
        %v575 = vpop.f32.mrb[0].mxu0
        %v576 = vpop.f32.mrb[0].mxu0
        %577 = vdwg.mxu0
        %v578 = vpack.c.bf16 %v573, %v573
        %v579 = vld [vmem:[#allocation7] sm:$0xf]
        %v580 = vld [vmem:[#allocation7 + $0x4] sm:$0xf]
        %s581 = scalar_lea.vmem [#allocation5], 4
        %v582 = vld [vmem:[%s581] sm:$0xf]
        %v584 = vsel %vm534, %v582, 0
        %586 = vmatprep.subr.bf16.mxu0 0
        %587 = vmatpush1.bf16.msra.mxu0 %v532
        %588 = vmatprep.subr.bf16.mxu0 0
        %589 = vmatpush1.bf16.msra.mxu0 0
        %590 = vmatprep.subr.bf16.mxu0 0
        %591 = vmatpush1.bf16.msra.mxu0 0
        %592 = vmatprep.subr.bf16.mxu0 0
        %593 = vmatpush1.bf16.msra.mxu0 0
        %594 = vmatprep.subr.bf16.mxu0 0
        %595 = vmatpush1.bf16.msra.mxu0 0
        %596 = vmatprep.subr.bf16.mxu0 0
        %597 = vmatpush1.bf16.msra.mxu0 0
        %598 = vmatprep.subr.bf16.mxu0 0
        %599 = vmatpush1.bf16.msra.mxu0 0
        %600 = vmatprep.subr.bf16.mxu0 0
        %601 = vmatpush1.bf16.msra.mxu0 0
        %602 = vmatprep.subr.bf16.mxu0 0
        %603 = vmatpush1.bf16.msra.mxu0 0
        %604 = vmatprep.subr.bf16.mxu0 0
        %605 = vmatpush1.bf16.msra.mxu0 0
        %606 = vmatprep.subr.bf16.mxu0 0
        %607 = vmatpush1.bf16.msra.mxu0 0
        %608 = vmatprep.subr.bf16.mxu0 0
        %609 = vmatpush1.bf16.msra.mxu0 0
        %610 = vmatprep.subr.bf16.mxu0 0
        %611 = vmatpush1.bf16.msra.mxu0 0
        %612 = vmatprep.subr.bf16.mxu0 0
        %613 = vmatpush1.bf16.msra.mxu0 0
        %614 = vmatprep.subr.bf16.mxu0 0
        %615 = vmatpush1.bf16.msra.mxu0 0
        %616 = vmatprep.subr.bf16.mxu0 0
        %617 = vmatpush1.bf16.msra.mxu0 0
        %618 = vmatprep.mubr.bf16.mxu0 0
        %619 = vmatmul.mubr.bf16.gmra.mrb[0].mxu0 %v584
        %v620 = vpop.f32.mrb[0].mxu0
        %v621 = vadd.f32 0.0, %v620
        %v622 = vpop.f32.mrb[0].mxu0
        %v623 = vpop.f32.mrb[0].mxu0
        %v624 = vpop.f32.mrb[0].mxu0
        %625 = vdwg.mxu0
        %v626 = vpack.c.bf16 %v621, %v621
        %s627 = scalar_lea.vmem [#allocation7], 8
        %v628 = vld [vmem:[%s627] sm:$0xf]
        %v629 = vld [vmem:[%s627 + $0x4] sm:$0xf]
        %v632 = vunpack.c.l.b16 %v628
        %v633 = vunpack.c.l.b16 %v629
        %v634 = vpack.c.b16 %v633, %v632
        %v637 = vsel %vm534, %v626, 0
        %639 = vmatprep.subr.bf16.mxu0 0
        %640 = vmatpush1.bf16.msra.mxu0 %v634
        %641 = vmatprep.subr.bf16.mxu0 0
        %642 = vmatpush1.bf16.msra.mxu0 0
        %643 = vmatprep.subr.bf16.mxu0 0
        %644 = vmatpush1.bf16.msra.mxu0 0
        %645 = vmatprep.subr.bf16.mxu0 0
        %646 = vmatpush1.bf16.msra.mxu0 0
        %647 = vmatprep.subr.bf16.mxu0 0
        %648 = vmatpush1.bf16.msra.mxu0 0
        %649 = vmatprep.subr.bf16.mxu0 0
        %650 = vmatpush1.bf16.msra.mxu0 0
        %651 = vmatprep.subr.bf16.mxu0 0
        %652 = vmatpush1.bf16.msra.mxu0 0
        %653 = vmatprep.subr.bf16.mxu0 0
        %654 = vmatpush1.bf16.msra.mxu0 0
        %655 = vmatprep.subr.bf16.mxu0 0
        %656 = vmatpush1.bf16.msra.mxu0 0
        %657 = vmatprep.subr.bf16.mxu0 0
        %658 = vmatpush1.bf16.msra.mxu0 0
        %659 = vmatprep.subr.bf16.mxu0 0
        %660 = vmatpush1.bf16.msra.mxu0 0
        %661 = vmatprep.subr.bf16.mxu0 0
        %662 = vmatpush1.bf16.msra.mxu0 0
        %663 = vmatprep.subr.bf16.mxu0 0
        %664 = vmatpush1.bf16.msra.mxu0 0
        %665 = vmatprep.subr.bf16.mxu0 0
        %666 = vmatpush1.bf16.msra.mxu0 0
        %667 = vmatprep.subr.bf16.mxu0 0
        %668 = vmatpush1.bf16.msra.mxu0 0
        %669 = vmatprep.subr.bf16.mxu0 0
        %670 = vmatpush1.bf16.msra.mxu0 0
        %671 = vmatprep.mubr.bf16.mxu0 0
        %672 = vmatmul.mubr.bf16.gmra.mrb[0].mxu0 %v637
        %v673 = vpop.f32.mrb[0].mxu0
        %v674 = vadd.f32 0.0, %v673
        %v675 = vpop.f32.mrb[0].mxu0
        %v676 = vpop.f32.mrb[0].mxu0
        %v677 = vpop.f32.mrb[0].mxu0
        %678 = vdwg.mxu0
        %v681 = vunpack.c.l.b16 %v579
        %v682 = vunpack.c.l.b16 %v580
        %v683 = vpack.c.b16 %v682, %v681
        %v686 = vsel %vm534, %v578, 0
        %688 = vmatprep.subr.bf16.mxu0 0
        %689 = vmatpush1.bf16.msra.mxu0 %v683
        %690 = vmatprep.subr.bf16.mxu0 0
        %691 = vmatpush1.bf16.msra.mxu0 0
        %692 = vmatprep.subr.bf16.mxu0 0
        %693 = vmatpush1.bf16.msra.mxu0 0
        %694 = vmatprep.subr.bf16.mxu0 0
        %695 = vmatpush1.bf16.msra.mxu0 0
        %696 = vmatprep.subr.bf16.mxu0 0
        %697 = vmatpush1.bf16.msra.mxu0 0
        %698 = vmatprep.subr.bf16.mxu0 0
        %699 = vmatpush1.bf16.msra.mxu0 0
        %700 = vmatprep.subr.bf16.mxu0 0
        %701 = vmatpush1.bf16.msra.mxu0 0
        %702 = vmatprep.subr.bf16.mxu0 0
        %703 = vmatpush1.bf16.msra.mxu0 0
        %704 = vmatprep.subr.bf16.mxu0 0
        %705 = vmatpush1.bf16.msra.mxu0 0
        %706 = vmatprep.subr.bf16.mxu0 0
        %707 = vmatpush1.bf16.msra.mxu0 0
        %708 = vmatprep.subr.bf16.mxu0 0
        %709 = vmatpush1.bf16.msra.mxu0 0
        %710 = vmatprep.subr.bf16.mxu0 0
        %711 = vmatpush1.bf16.msra.mxu0 0
        %712 = vmatprep.subr.bf16.mxu0 0
        %713 = vmatpush1.bf16.msra.mxu0 0
        %714 = vmatprep.subr.bf16.mxu0 0
        %715 = vmatpush1.bf16.msra.mxu0 0
        %716 = vmatprep.subr.bf16.mxu0 0
        %717 = vmatpush1.bf16.msra.mxu0 0
        %718 = vmatprep.subr.bf16.mxu0 0
        %719 = vmatpush1.bf16.msra.mxu0 0
        %720 = vmatprep.mubr.bf16.mxu0 0
        %721 = vmatmul.mubr.bf16.gmra.mrb[0].mxu0 %v686
        %v722 = vpop.f32.mrb[0].mxu0
        %v723 = vadd.f32 %v674, %v722
        %v724 = vpop.f32.mrb[0].mxu0
        %v725 = vpop.f32.mrb[0].mxu0
        %v726 = vpop.f32.mrb[0].mxu0
        %727 = vdwg.mxu0
        %s728 = scalar_lea.vmem [#allocation5], 8
        %v729 = vld [vmem:[%s728] sm:$0xf]
        %v731 = vsel %vm534, %v729, 0
        %733 = vmatprep.subr.bf16.mxu0 0
        %734 = vmatpush1.bf16.msra.mxu0 %v532
        %735 = vmatprep.subr.bf16.mxu0 0
        %736 = vmatpush1.bf16.msra.mxu0 0
        %737 = vmatprep.subr.bf16.mxu0 0
        %738 = vmatpush1.bf16.msra.mxu0 0
        %739 = vmatprep.subr.bf16.mxu0 0
        %740 = vmatpush1.bf16.msra.mxu0 0
        %741 = vmatprep.subr.bf16.mxu0 0
        %742 = vmatpush1.bf16.msra.mxu0 0
        %743 = vmatprep.subr.bf16.mxu0 0
        %744 = vmatpush1.bf16.msra.mxu0 0
        %745 = vmatprep.subr.bf16.mxu0 0
        %746 = vmatpush1.bf16.msra.mxu0 0
        %747 = vmatprep.subr.bf16.mxu0 0
        %748 = vmatpush1.bf16.msra.mxu0 0
        %749 = vmatprep.subr.bf16.mxu0 0
        %750 = vmatpush1.bf16.msra.mxu0 0
        %751 = vmatprep.subr.bf16.mxu0 0
        %752 = vmatpush1.bf16.msra.mxu0 0
        %753 = vmatprep.subr.bf16.mxu0 0
        %754 = vmatpush1.bf16.msra.mxu0 0
        %755 = vmatprep.subr.bf16.mxu0 0
        %756 = vmatpush1.bf16.msra.mxu0 0
        %757 = vmatprep.subr.bf16.mxu0 0
        %758 = vmatpush1.bf16.msra.mxu0 0
        %759 = vmatprep.subr.bf16.mxu0 0
        %760 = vmatpush1.bf16.msra.mxu0 0
        %761 = vmatprep.subr.bf16.mxu0 0
        %762 = vmatpush1.bf16.msra.mxu0 0
        %763 = vmatprep.subr.bf16.mxu0 0
        %764 = vmatpush1.bf16.msra.mxu0 0
        %765 = vmatprep.mubr.bf16.mxu0 0
        %766 = vmatmul.mubr.bf16.gmra.mrb[0].mxu0 %v731
        %v767 = vpop.f32.mrb[0].mxu0
        %v768 = vadd.f32 0.0, %v767
        %v769 = vpop.f32.mrb[0].mxu0
        %v770 = vpop.f32.mrb[0].mxu0
        %v771 = vpop.f32.mrb[0].mxu0
        %772 = vdwg.mxu0
        %v773 = vpack.c.bf16 %v768, %v768
        %s774 = scalar_lea.vmem [#allocation7], 16
        %v775 = vld [vmem:[%s774] sm:$0xf]
        %v776 = vld [vmem:[%s774 + $0x4] sm:$0xf]
        %v779 = vunpack.c.l.b16 %v775
        %v780 = vunpack.c.l.b16 %v776
        %v781 = vpack.c.b16 %v780, %v779
        %v784 = vsel %vm534, %v773, 0
        %786 = vmatprep.subr.bf16.mxu0 0
        %787 = vmatpush1.bf16.msra.mxu0 %v781
        %788 = vmatprep.subr.bf16.mxu0 0
        %789 = vmatpush1.bf16.msra.mxu0 0
        %790 = vmatprep.subr.bf16.mxu0 0
        %791 = vmatpush1.bf16.msra.mxu0 0
        %792 = vmatprep.subr.bf16.mxu0 0
        %793 = vmatpush1.bf16.msra.mxu0 0
        %794 = vmatprep.subr.bf16.mxu0 0
        %795 = vmatpush1.bf16.msra.mxu0 0
        %796 = vmatprep.subr.bf16.mxu0 0
        %797 = vmatpush1.bf16.msra.mxu0 0
        %798 = vmatprep.subr.bf16.mxu0 0
        %799 = vmatpush1.bf16.msra.mxu0 0
        %800 = vmatprep.subr.bf16.mxu0 0
        %801 = vmatpush1.bf16.msra.mxu0 0
        %802 = vmatprep.subr.bf16.mxu0 0
        %803 = vmatpush1.bf16.msra.mxu0 0
        %804 = vmatprep.subr.bf16.mxu0 0
        %805 = vmatpush1.bf16.msra.mxu0 0
        %806 = vmatprep.subr.bf16.mxu0 0
        %807 = vmatpush1.bf16.msra.mxu0 0
        %808 = vmatprep.subr.bf16.mxu0 0
        %809 = vmatpush1.bf16.msra.mxu0 0
        %810 = vmatprep.subr.bf16.mxu0 0
        %811 = vmatpush1.bf16.msra.mxu0 0
        %812 = vmatprep.subr.bf16.mxu0 0
        %813 = vmatpush1.bf16.msra.mxu0 0
        %814 = vmatprep.subr.bf16.mxu0 0
        %815 = vmatpush1.bf16.msra.mxu0 0
        %816 = vmatprep.subr.bf16.mxu0 0
        %817 = vmatpush1.bf16.msra.mxu0 0
        %818 = vmatprep.mubr.bf16.mxu0 0
        %819 = vmatmul.mubr.bf16.gmra.mrb[0].mxu0 %v784
        %v820 = vpop.f32.mrb[0].mxu0
        %v821 = vadd.f32 0.0, %v820
        %v822 = vpop.f32.mrb[0].mxu0
        %v823 = vpop.f32.mrb[0].mxu0
        %v824 = vpop.f32.mrb[0].mxu0
        %825 = vdwg.mxu0
        %v826 = vadd.f32 %v723, %v821
        %s827 = scalar_lea.vmem [#allocation5], 12
        %v828 = vld [vmem:[%s827] sm:$0xf]
        %v830 = vsel %vm534, %v828, 0
        %832 = vmatprep.subr.bf16.mxu0 0
        %833 = vmatpush1.bf16.msra.mxu0 %v532
        %834 = vmatprep.subr.bf16.mxu0 0
        %835 = vmatpush1.bf16.msra.mxu0 0
        %836 = vmatprep.subr.bf16.mxu0 0
        %837 = vmatpush1.bf16.msra.mxu0 0
        %838 = vmatprep.subr.bf16.mxu0 0
        %839 = vmatpush1.bf16.msra.mxu0 0
        %840 = vmatprep.subr.bf16.mxu0 0
        %841 = vmatpush1.bf16.msra.mxu0 0
        %842 = vmatprep.subr.bf16.mxu0 0
        %843 = vmatpush1.bf16.msra.mxu0 0
        %844 = vmatprep.subr.bf16.mxu0 0
        %845 = vmatpush1.bf16.msra.mxu0 0
        %846 = vmatprep.subr.bf16.mxu0 0
        %847 = vmatpush1.bf16.msra.mxu0 0
        %848 = vmatprep.subr.bf16.mxu0 0
        %849 = vmatpush1.bf16.msra.mxu0 0
        %850 = vmatprep.subr.bf16.mxu0 0
        %851 = vmatpush1.bf16.msra.mxu0 0
        %852 = vmatprep.subr.bf16.mxu0 0
        %853 = vmatpush1.bf16.msra.mxu0 0
        %854 = vmatprep.subr.bf16.mxu0 0
        %855 = vmatpush1.bf16.msra.mxu0 0
        %856 = vmatprep.subr.bf16.mxu0 0
        %857 = vmatpush1.bf16.msra.mxu0 0
        %858 = vmatprep.subr.bf16.mxu0 0
        %859 = vmatpush1.bf16.msra.mxu0 0
        %860 = vmatprep.subr.bf16.mxu0 0
        %861 = vmatpush1.bf16.msra.mxu0 0
        %862 = vmatprep.subr.bf16.mxu0 0
        %863 = vmatpush1.bf16.msra.mxu0 0
        %864 = vmatprep.mubr.bf16.mxu0 0
        %865 = vmatmul.mubr.bf16.gmra.mrb[0].mxu0 %v830
        %v866 = vpop.f32.mrb[0].mxu0
        %v867 = vadd.f32 0.0, %v866
        %v868 = vpop.f32.mrb[0].mxu0
        %v869 = vpop.f32.mrb[0].mxu0
        %v870 = vpop.f32.mrb[0].mxu0
        %871 = vdwg.mxu0
        %v872 = vpack.c.bf16 %v867, %v867
        %s873 = scalar_lea.vmem [#allocation7], 24
        %v874 = vld [vmem:[%s873] sm:$0xf]
        %v875 = vld [vmem:[%s873 + $0x4] sm:$0xf]
        %v878 = vunpack.c.l.b16 %v874
        %v879 = vunpack.c.l.b16 %v875
        %v880 = vpack.c.b16 %v879, %v878
        %v883 = vsel %vm534, %v872, 0
        %885 = vmatprep.subr.bf16.mxu0 0
        %886 = vmatpush1.bf16.msra.mxu0 %v880
        %887 = vmatprep.subr.bf16.mxu0 0
        %888 = vmatpush1.bf16.msra.mxu0 0
        %889 = vmatprep.subr.bf16.mxu0 0
        %890 = vmatpush1.bf16.msra.mxu0 0
        %891 = vmatprep.subr.bf16.mxu0 0
        %892 = vmatpush1.bf16.msra.mxu0 0
        %893 = vmatprep.subr.bf16.mxu0 0
        %894 = vmatpush1.bf16.msra.mxu0 0
        %895 = vmatprep.subr.bf16.mxu0 0
        %896 = vmatpush1.bf16.msra.mxu0 0
        %897 = vmatprep.subr.bf16.mxu0 0
        %898 = vmatpush1.bf16.msra.mxu0 0
        %899 = vmatprep.subr.bf16.mxu0 0
        %900 = vmatpush1.bf16.msra.mxu0 0
        %901 = vmatprep.subr.bf16.mxu0 0
        %902 = vmatpush1.bf16.msra.mxu0 0
        %903 = vmatprep.subr.bf16.mxu0 0
        %904 = vmatpush1.bf16.msra.mxu0 0
        %905 = vmatprep.subr.bf16.mxu0 0
        %906 = vmatpush1.bf16.msra.mxu0 0
        %907 = vmatprep.subr.bf16.mxu0 0
        %908 = vmatpush1.bf16.msra.mxu0 0
        %909 = vmatprep.subr.bf16.mxu0 0
        %910 = vmatpush1.bf16.msra.mxu0 0
        %911 = vmatprep.subr.bf16.mxu0 0
        %912 = vmatpush1.bf16.msra.mxu0 0
        %913 = vmatprep.subr.bf16.mxu0 0
        %914 = vmatpush1.bf16.msra.mxu0 0
        %915 = vmatprep.subr.bf16.mxu0 0
        %916 = vmatpush1.bf16.msra.mxu0 0
        %917 = vmatprep.mubr.bf16.mxu0 0
        %918 = vmatmul.mubr.bf16.gmra.mrb[0].mxu0 %v883
        %v919 = vpop.f32.mrb[0].mxu0
        %v920 = vadd.f32 0.0, %v919
        %v921 = vpop.f32.mrb[0].mxu0
        %v922 = vpop.f32.mrb[0].mxu0
        %v923 = vpop.f32.mrb[0].mxu0
        %924 = vdwg.mxu0
        %v925 = vadd.f32 %v826, %v920
        %v926 = vld [vmem:[%s3] sm:$0x1]
        %v928 = vlaneseq
        %v929 = vshrl.u32 %v928, 7
        %v930 = vsub.s32 0, %v929
        %v931 = vrot.slane %v926, %v930
        %v933 = vadd.f32 %v925, %v931
        %v934 = vmax.f32 %v933, 0.0
        %v935 = vpack.c.bf16 %v934, %v934
        %v936 = vld [vmem:[#allocation8] sm:$0x3]
        %vm937 = vcmask 64512
        %v939 = vsel %vm937, %v936, 0
        %vm941 = vcmask 1043456
        %v943 = vsel %vm941, %v935, 0
        %945 = vmatprep.subr.bf16.mxu0 0
        %946 = vmatpush1.bf16.msra.mxu0 %v943
        %947 = vmatprep.subr.bf16.mxu0 0
        %948 = vmatpush1.bf16.msra.mxu0 0
        %949 = vmatprep.subr.bf16.mxu0 0
        %950 = vmatpush1.bf16.msra.mxu0 0
        %951 = vmatprep.subr.bf16.mxu0 0
        %952 = vmatpush1.bf16.msra.mxu0 0
        %953 = vmatprep.subr.bf16.mxu0 0
        %954 = vmatpush1.bf16.msra.mxu0 0
        %955 = vmatprep.subr.bf16.mxu0 0
        %956 = vmatpush1.bf16.msra.mxu0 0
        %957 = vmatprep.subr.bf16.mxu0 0
        %958 = vmatpush1.bf16.msra.mxu0 0
        %959 = vmatprep.subr.bf16.mxu0 0
        %960 = vmatpush1.bf16.msra.mxu0 0
        %961 = vmatprep.subr.bf16.mxu0 0
        %962 = vmatpush1.bf16.msra.mxu0 0
        %963 = vmatprep.subr.bf16.mxu0 0
        %964 = vmatpush1.bf16.msra.mxu0 0
        %965 = vmatprep.subr.bf16.mxu0 0
        %966 = vmatpush1.bf16.msra.mxu0 0
        %967 = vmatprep.subr.bf16.mxu0 0
        %968 = vmatpush1.bf16.msra.mxu0 0
        %969 = vmatprep.subr.bf16.mxu0 0
        %970 = vmatpush1.bf16.msra.mxu0 0
        %971 = vmatprep.subr.bf16.mxu0 0
        %972 = vmatpush1.bf16.msra.mxu0 0
        %973 = vmatprep.subr.bf16.mxu0 0
        %974 = vmatpush1.bf16.msra.mxu0 0
        %975 = vmatprep.subr.bf16.mxu0 0
        %976 = vmatpush1.bf16.msra.mxu0 0
        %977 = vmatprep.mubr.bf16.mxu0 0
        %978 = vmatmul.mubr.bf16.gmra.mrb[0].mxu0 %v939
        %v979 = vpop.f32.mrb[0].mxu0
        %v980 = vadd.f32 0.0, %v979
        %v981 = vpop.f32.mrb[0].mxu0
        %v982 = vpop.f32.mrb[0].mxu0
        %v983 = vpop.f32.mrb[0].mxu0
        %984 = vdwg.mxu0
        %v985 = vpack.c.bf16 %v980, %v980
        %v986 = vld [vmem:[#allocation10] sm:$0xf]
        %v987 = vld [vmem:[#allocation10 + $0x4] sm:$0xf]
        %v988 = vld [vmem:[#allocation10 + $0x8] sm:$0xf]
        %v989 = vld [vmem:[#allocation10 + $0xc] sm:$0xf]
        %s990 = scalar_lea.vmem [#allocation8], 2
        %v991 = vld [vmem:[%s990] sm:$0x3]
        %v993 = vsel %vm937, %v991, 0
        %995 = vmatprep.subr.bf16.mxu0 0
        %996 = vmatpush1.bf16.msra.mxu0 %v943
        %997 = vmatprep.subr.bf16.mxu0 0
        %998 = vmatpush1.bf16.msra.mxu0 0
        %999 = vmatprep.subr.bf16.mxu0 0
        %1000 = vmatpush1.bf16.msra.mxu0 0
        %1001 = vmatprep.subr.bf16.mxu0 0
        %1002 = vmatpush1.bf16.msra.mxu0 0
        %1003 = vmatprep.subr.bf16.mxu0 0
        %1004 = vmatpush1.bf16.msra.mxu0 0
        %1005 = vmatprep.subr.bf16.mxu0 0
        %1006 = vmatpush1.bf16.msra.mxu0 0
        %1007 = vmatprep.subr.bf16.mxu0 0
        %1008 = vmatpush1.bf16.msra.mxu0 0
        %1009 = vmatprep.subr.bf16.mxu0 0
        %1010 = vmatpush1.bf16.msra.mxu0 0
        %1011 = vmatprep.subr.bf16.mxu0 0
        %1012 = vmatpush1.bf16.msra.mxu0 0
        %1013 = vmatprep.subr.bf16.mxu0 0
        %1014 = vmatpush1.bf16.msra.mxu0 0
        %1015 = vmatprep.subr.bf16.mxu0 0
        %1016 = vmatpush1.bf16.msra.mxu0 0
        %1017 = vmatprep.subr.bf16.mxu0 0
        %1018 = vmatpush1.bf16.msra.mxu0 0
        %1019 = vmatprep.subr.bf16.mxu0 0
        %1020 = vmatpush1.bf16.msra.mxu0 0
        %1021 = vmatprep.subr.bf16.mxu0 0
        %1022 = vmatpush1.bf16.msra.mxu0 0
        %1023 = vmatprep.subr.bf16.mxu0 0
        %1024 = vmatpush1.bf16.msra.mxu0 0
        %1025 = vmatprep.subr.bf16.mxu0 0
        %1026 = vmatpush1.bf16.msra.mxu0 0
        %1027 = vmatprep.mubr.bf16.mxu0 0
        %1028 = vmatmul.mubr.bf16.gmra.mrb[0].mxu0 %v993
        %v1029 = vpop.f32.mrb[0].mxu0
        %v1030 = vadd.f32 0.0, %v1029
        %v1031 = vpop.f32.mrb[0].mxu0
        %v1032 = vpop.f32.mrb[0].mxu0
        %v1033 = vpop.f32.mrb[0].mxu0
        %1034 = vdwg.mxu0
        %v1035 = vpack.c.bf16 %v1030, %v1030
        %s1036 = scalar_lea.vmem [#allocation10], 16
        %v1037 = vld [vmem:[%s1036] sm:$0xf]
        %v1038 = vld [vmem:[%s1036 + $0x4] sm:$0xf]
        %v1039 = vld [vmem:[%s1036 + $0x8] sm:$0xf]
        %v1040 = vld [vmem:[%s1036 + $0xc] sm:$0xf]
        %v1045 = vunpack.c.l.b16 %v1037
        %v1046 = vunpack.c.l.b16 %v1038
        %v1047 = vunpack.c.l.b16 %v1039
        %v1048 = vunpack.c.l.b16 %v1040
        %v1049 = vpack.c.b16 %v1046, %v1045
        %v1050 = vpack.c.b16 %v1048, %v1047
        %vm1053 = vcmask 261120
        %v1055 = vsel %vm1053, %v1035, 0
        %1057 = vmatprep.subr.bf16.mxu0 0
        %1058 = vmatpush1.bf16.msra.mxu0 %v1049
        %1059 = vmatprep.subr.bf16.mxu0 0
        %1060 = vmatpush1.bf16.msra.mxu0 %v1050
        %1061 = vmatprep.subr.bf16.mxu0 0
        %1062 = vmatpush1.bf16.msra.mxu0 0
        %1063 = vmatprep.subr.bf16.mxu0 0
        %1064 = vmatpush1.bf16.msra.mxu0 0
        %1065 = vmatprep.subr.bf16.mxu0 0
        %1066 = vmatpush1.bf16.msra.mxu0 0
        %1067 = vmatprep.subr.bf16.mxu0 0
        %1068 = vmatpush1.bf16.msra.mxu0 0
        %1069 = vmatprep.subr.bf16.mxu0 0
        %1070 = vmatpush1.bf16.msra.mxu0 0
        %1071 = vmatprep.subr.bf16.mxu0 0
        %1072 = vmatpush1.bf16.msra.mxu0 0
        %1073 = vmatprep.subr.bf16.mxu0 0
        %1074 = vmatpush1.bf16.msra.mxu0 0
        %1075 = vmatprep.subr.bf16.mxu0 0
        %1076 = vmatpush1.bf16.msra.mxu0 0
        %1077 = vmatprep.subr.bf16.mxu0 0
        %1078 = vmatpush1.bf16.msra.mxu0 0
        %1079 = vmatprep.subr.bf16.mxu0 0
        %1080 = vmatpush1.bf16.msra.mxu0 0
        %1081 = vmatprep.subr.bf16.mxu0 0
        %1082 = vmatpush1.bf16.msra.mxu0 0
        %1083 = vmatprep.subr.bf16.mxu0 0
        %1084 = vmatpush1.bf16.msra.mxu0 0
        %1085 = vmatprep.subr.bf16.mxu0 0
        %1086 = vmatpush1.bf16.msra.mxu0 0
        %1087 = vmatprep.subr.bf16.mxu0 0
        %1088 = vmatpush1.bf16.msra.mxu0 0
        %1089 = vmatprep.mubr.bf16.mxu0 0
        %1090 = vmatmul.mubr.bf16.gmra.mrb[0].mxu0 %v1055
        %v1091 = vpop.f32.mrb[0].mxu0
        %v1092 = vadd.f32 0.0, %v1091
        %v1093 = vpop.f32.mrb[0].mxu0
        %v1094 = vpop.f32.mrb[0].mxu0
        %v1095 = vpop.f32.mrb[0].mxu0
        %1096 = vdwg.mxu0
        %v1101 = vunpack.c.l.b16 %v986
        %v1102 = vunpack.c.l.b16 %v987
        %v1103 = vunpack.c.l.b16 %v988
        %v1104 = vunpack.c.l.b16 %v989
        %v1105 = vpack.c.b16 %v1102, %v1101
        %v1106 = vpack.c.b16 %v1104, %v1103
        %v1110 = vsel %vm1053, %v985, 0
        %1112 = vmatprep.subr.bf16.mxu0 0
        %1113 = vmatpush1.bf16.msra.mxu0 %v1105
        %1114 = vmatprep.subr.bf16.mxu0 0
        %1115 = vmatpush1.bf16.msra.mxu0 %v1106
        %1116 = vmatprep.subr.bf16.mxu0 0
        %1117 = vmatpush1.bf16.msra.mxu0 0
        %1118 = vmatprep.subr.bf16.mxu0 0
        %1119 = vmatpush1.bf16.msra.mxu0 0
        %1120 = vmatprep.subr.bf16.mxu0 0
        %1121 = vmatpush1.bf16.msra.mxu0 0
        %1122 = vmatprep.subr.bf16.mxu0 0
        %1123 = vmatpush1.bf16.msra.mxu0 0
        %1124 = vmatprep.subr.bf16.mxu0 0
        %1125 = vmatpush1.bf16.msra.mxu0 0
        %1126 = vmatprep.subr.bf16.mxu0 0
        %1127 = vmatpush1.bf16.msra.mxu0 0
        %1128 = vmatprep.subr.bf16.mxu0 0
        %1129 = vmatpush1.bf16.msra.mxu0 0
        %1130 = vmatprep.subr.bf16.mxu0 0
        %1131 = vmatpush1.bf16.msra.mxu0 0
        %1132 = vmatprep.subr.bf16.mxu0 0
        %1133 = vmatpush1.bf16.msra.mxu0 0
        %1134 = vmatprep.subr.bf16.mxu0 0
        %1135 = vmatpush1.bf16.msra.mxu0 0
        %1136 = vmatprep.subr.bf16.mxu0 0
        %1137 = vmatpush1.bf16.msra.mxu0 0
        %1138 = vmatprep.subr.bf16.mxu0 0
        %1139 = vmatpush1.bf16.msra.mxu0 0
        %1140 = vmatprep.subr.bf16.mxu0 0
        %1141 = vmatpush1.bf16.msra.mxu0 0
        %1142 = vmatprep.subr.bf16.mxu0 0
        %1143 = vmatpush1.bf16.msra.mxu0 0
        %1144 = vmatprep.mubr.bf16.mxu0 0
        %1145 = vmatmul.mubr.bf16.gmra.mrb[0].mxu0 %v1110
        %v1146 = vpop.f32.mrb[0].mxu0
        %v1147 = vadd.f32 %v1092, %v1146
        %v1148 = vpop.f32.mrb[0].mxu0
        %v1149 = vpop.f32.mrb[0].mxu0
        %v1150 = vpop.f32.mrb[0].mxu0
        %1151 = vdwg.mxu0
        %s1152 = scalar_lea.vmem [#allocation8], 4
        %v1153 = vld [vmem:[%s1152] sm:$0x3]
        %v1155 = vsel %vm937, %v1153, 0
        %1157 = vmatprep.subr.bf16.mxu0 0
        %1158 = vmatpush1.bf16.msra.mxu0 %v943
        %1159 = vmatprep.subr.bf16.mxu0 0
        %1160 = vmatpush1.bf16.msra.mxu0 0
        %1161 = vmatprep.subr.bf16.mxu0 0
        %1162 = vmatpush1.bf16.msra.mxu0 0
        %1163 = vmatprep.subr.bf16.mxu0 0
        %1164 = vmatpush1.bf16.msra.mxu0 0
        %1165 = vmatprep.subr.bf16.mxu0 0
        %1166 = vmatpush1.bf16.msra.mxu0 0
        %1167 = vmatprep.subr.bf16.mxu0 0
        %1168 = vmatpush1.bf16.msra.mxu0 0
        %1169 = vmatprep.subr.bf16.mxu0 0
        %1170 = vmatpush1.bf16.msra.mxu0 0
        %1171 = vmatprep.subr.bf16.mxu0 0
        %1172 = vmatpush1.bf16.msra.mxu0 0
        %1173 = vmatprep.subr.bf16.mxu0 0
        %1174 = vmatpush1.bf16.msra.mxu0 0
        %1175 = vmatprep.subr.bf16.mxu0 0
        %1176 = vmatpush1.bf16.msra.mxu0 0
        %1177 = vmatprep.subr.bf16.mxu0 0
        %1178 = vmatpush1.bf16.msra.mxu0 0
        %1179 = vmatprep.subr.bf16.mxu0 0
        %1180 = vmatpush1.bf16.msra.mxu0 0
        %1181 = vmatprep.subr.bf16.mxu0 0
        %1182 = vmatpush1.bf16.msra.mxu0 0
        %1183 = vmatprep.subr.bf16.mxu0 0
        %1184 = vmatpush1.bf16.msra.mxu0 0
        %1185 = vmatprep.subr.bf16.mxu0 0
        %1186 = vmatpush1.bf16.msra.mxu0 0
        %1187 = vmatprep.subr.bf16.mxu0 0
        %1188 = vmatpush1.bf16.msra.mxu0 0
        %1189 = vmatprep.mubr.bf16.mxu0 0
        %1190 = vmatmul.mubr.bf16.gmra.mrb[0].mxu0 %v1155
        %v1191 = vpop.f32.mrb[0].mxu0
        %v1192 = vadd.f32 0.0, %v1191
        %v1193 = vpop.f32.mrb[0].mxu0
        %v1194 = vpop.f32.mrb[0].mxu0
        %v1195 = vpop.f32.mrb[0].mxu0
        %1196 = vdwg.mxu0
        %v1197 = vpack.c.bf16 %v1192, %v1192
        %s1198 = scalar_lea.vmem [#allocation10], 32
        %v1199 = vld [vmem:[%s1198] sm:$0xf]
        %v1200 = vld [vmem:[%s1198 + $0x4] sm:$0xf]
        %v1201 = vld [vmem:[%s1198 + $0x8] sm:$0xf]
        %v1202 = vld [vmem:[%s1198 + $0xc] sm:$0xf]
        %v1207 = vunpack.c.l.b16 %v1199
        %v1208 = vunpack.c.l.b16 %v1200
        %v1209 = vunpack.c.l.b16 %v1201
        %v1210 = vunpack.c.l.b16 %v1202
        %v1211 = vpack.c.b16 %v1208, %v1207
        %v1212 = vpack.c.b16 %v1210, %v1209
        %v1216 = vsel %vm1053, %v1197, 0
        %1218 = vmatprep.subr.bf16.mxu0 0
        %1219 = vmatpush1.bf16.msra.mxu0 %v1211
        %1220 = vmatprep.subr.bf16.mxu0 0
        %1221 = vmatpush1.bf16.msra.mxu0 %v1212
        %1222 = vmatprep.subr.bf16.mxu0 0
        %1223 = vmatpush1.bf16.msra.mxu0 0
        %1224 = vmatprep.subr.bf16.mxu0 0
        %1225 = vmatpush1.bf16.msra.mxu0 0
        %1226 = vmatprep.subr.bf16.mxu0 0
        %1227 = vmatpush1.bf16.msra.mxu0 0
        %1228 = vmatprep.subr.bf16.mxu0 0
        %1229 = vmatpush1.bf16.msra.mxu0 0
        %1230 = vmatprep.subr.bf16.mxu0 0
        %1231 = vmatpush1.bf16.msra.mxu0 0
        %1232 = vmatprep.subr.bf16.mxu0 0
        %1233 = vmatpush1.bf16.msra.mxu0 0
        %1234 = vmatprep.subr.bf16.mxu0 0
        %1235 = vmatpush1.bf16.msra.mxu0 0
        %1236 = vmatprep.subr.bf16.mxu0 0
        %1237 = vmatpush1.bf16.msra.mxu0 0
        %1238 = vmatprep.subr.bf16.mxu0 0
        %1239 = vmatpush1.bf16.msra.mxu0 0
        %1240 = vmatprep.subr.bf16.mxu0 0
        %1241 = vmatpush1.bf16.msra.mxu0 0
        %1242 = vmatprep.subr.bf16.mxu0 0
        %1243 = vmatpush1.bf16.msra.mxu0 0
        %1244 = vmatprep.subr.bf16.mxu0 0
        %1245 = vmatpush1.bf16.msra.mxu0 0
        %1246 = vmatprep.subr.bf16.mxu0 0
        %1247 = vmatpush1.bf16.msra.mxu0 0
        %1248 = vmatprep.subr.bf16.mxu0 0
        %1249 = vmatpush1.bf16.msra.mxu0 0
        %1250 = vmatprep.mubr.bf16.mxu0 0
        %1251 = vmatmul.mubr.bf16.gmra.mrb[0].mxu0 %v1216
        %v1252 = vpop.f32.mrb[0].mxu0
        %v1253 = vadd.f32 0.0, %v1252
        %v1254 = vpop.f32.mrb[0].mxu0
        %v1255 = vpop.f32.mrb[0].mxu0
        %v1256 = vpop.f32.mrb[0].mxu0
        %1257 = vdwg.mxu0
        %v1258 = vadd.f32 %v1147, %v1253
        %s1259 = scalar_lea.vmem [#allocation8], 6
        %v1260 = vld [vmem:[%s1259] sm:$0x3]
        %v1262 = vsel %vm937, %v1260, 0
        %1264 = vmatprep.subr.bf16.mxu0 0
        %1265 = vmatpush1.bf16.msra.mxu0 %v943
        %1266 = vmatprep.subr.bf16.mxu0 0
        %1267 = vmatpush1.bf16.msra.mxu0 0
        %1268 = vmatprep.subr.bf16.mxu0 0
        %1269 = vmatpush1.bf16.msra.mxu0 0
        %1270 = vmatprep.subr.bf16.mxu0 0
        %1271 = vmatpush1.bf16.msra.mxu0 0
        %1272 = vmatprep.subr.bf16.mxu0 0
        %1273 = vmatpush1.bf16.msra.mxu0 0
        %1274 = vmatprep.subr.bf16.mxu0 0
        %1275 = vmatpush1.bf16.msra.mxu0 0
        %1276 = vmatprep.subr.bf16.mxu0 0
        %1277 = vmatpush1.bf16.msra.mxu0 0
        %1278 = vmatprep.subr.bf16.mxu0 0
        %1279 = vmatpush1.bf16.msra.mxu0 0
        %1280 = vmatprep.subr.bf16.mxu0 0
        %1281 = vmatpush1.bf16.msra.mxu0 0
        %1282 = vmatprep.subr.bf16.mxu0 0
        %1283 = vmatpush1.bf16.msra.mxu0 0
        %1284 = vmatprep.subr.bf16.mxu0 0
        %1285 = vmatpush1.bf16.msra.mxu0 0
        %1286 = vmatprep.subr.bf16.mxu0 0
        %1287 = vmatpush1.bf16.msra.mxu0 0
        %1288 = vmatprep.subr.bf16.mxu0 0
        %1289 = vmatpush1.bf16.msra.mxu0 0
        %1290 = vmatprep.subr.bf16.mxu0 0
        %1291 = vmatpush1.bf16.msra.mxu0 0
        %1292 = vmatprep.subr.bf16.mxu0 0
        %1293 = vmatpush1.bf16.msra.mxu0 0
        %1294 = vmatprep.subr.bf16.mxu0 0
        %1295 = vmatpush1.bf16.msra.mxu0 0
        %1296 = vmatprep.mubr.bf16.mxu0 0
        %1297 = vmatmul.mubr.bf16.gmra.mrb[0].mxu0 %v1262
        %v1298 = vpop.f32.mrb[0].mxu0
        %v1299 = vadd.f32 0.0, %v1298
        %v1300 = vpop.f32.mrb[0].mxu0
        %v1301 = vpop.f32.mrb[0].mxu0
        %v1302 = vpop.f32.mrb[0].mxu0
        %1303 = vdwg.mxu0
        %v1304 = vpack.c.bf16 %v1299, %v1299
        %s1305 = scalar_lea.vmem [#allocation10], 48
        %v1306 = vld [vmem:[%s1305] sm:$0xf]
        %v1307 = vld [vmem:[%s1305 + $0x4] sm:$0xf]
        %v1308 = vld [vmem:[%s1305 + $0x8] sm:$0xf]
        %v1309 = vld [vmem:[%s1305 + $0xc] sm:$0xf]
        %v1314 = vunpack.c.l.b16 %v1306
        %v1315 = vunpack.c.l.b16 %v1307
        %v1316 = vunpack.c.l.b16 %v1308
        %v1317 = vunpack.c.l.b16 %v1309
        %v1318 = vpack.c.b16 %v1315, %v1314
        %v1319 = vpack.c.b16 %v1317, %v1316
        %v1323 = vsel %vm1053, %v1304, 0
        %1325 = vmatprep.subr.bf16.mxu0 0
        %1326 = vmatpush1.bf16.msra.mxu0 %v1318
        %1327 = vmatprep.subr.bf16.mxu0 0
        %1328 = vmatpush1.bf16.msra.mxu0 %v1319
        %1329 = vmatprep.subr.bf16.mxu0 0
        %1330 = vmatpush1.bf16.msra.mxu0 0
        %1331 = vmatprep.subr.bf16.mxu0 0
        %1332 = vmatpush1.bf16.msra.mxu0 0
        %1333 = vmatprep.subr.bf16.mxu0 0
        %1334 = vmatpush1.bf16.msra.mxu0 0
        %1335 = vmatprep.subr.bf16.mxu0 0
        %1336 = vmatpush1.bf16.msra.mxu0 0
        %1337 = vmatprep.subr.bf16.mxu0 0
        %1338 = vmatpush1.bf16.msra.mxu0 0
        %1339 = vmatprep.subr.bf16.mxu0 0
        %1340 = vmatpush1.bf16.msra.mxu0 0
        %1341 = vmatprep.subr.bf16.mxu0 0
        %1342 = vmatpush1.bf16.msra.mxu0 0
        %1343 = vmatprep.subr.bf16.mxu0 0
        %1344 = vmatpush1.bf16.msra.mxu0 0
        %1345 = vmatprep.subr.bf16.mxu0 0
        %1346 = vmatpush1.bf16.msra.mxu0 0
        %1347 = vmatprep.subr.bf16.mxu0 0
        %1348 = vmatpush1.bf16.msra.mxu0 0
        %1349 = vmatprep.subr.bf16.mxu0 0
        %1350 = vmatpush1.bf16.msra.mxu0 0
        %1351 = vmatprep.subr.bf16.mxu0 0
        %1352 = vmatpush1.bf16.msra.mxu0 0
        %1353 = vmatprep.subr.bf16.mxu0 0
        %1354 = vmatpush1.bf16.msra.mxu0 0
        %1355 = vmatprep.subr.bf16.mxu0 0
        %1356 = vmatpush1.bf16.msra.mxu0 0
        %1357 = vmatprep.mubr.bf16.mxu0 0
        %1358 = vmatmul.mubr.bf16.gmra.mrb[0].mxu0 %v1323
        %v1359 = vpop.f32.mrb[0].mxu0
        %v1360 = vadd.f32 0.0, %v1359
        %v1361 = vpop.f32.mrb[0].mxu0
        %v1362 = vpop.f32.mrb[0].mxu0
        %v1363 = vpop.f32.mrb[0].mxu0
        %1364 = vdwg.mxu0
        %v1365 = vadd.f32 %v1258, %v1360
        %v1366 = vld [vmem:[#allocation11] sm:$0x1]
        %v1368 = vlaneseq
        %v1369 = vshrl.u32 %v1368, 7
        %v1370 = vsub.s32 0, %v1369
        %v1371 = vrot.slane %v1366, %v1370
        %v1373 = vadd.f32 %v1365, %v1371
        %v1374 = vmax.f32 %v1373, 0.0
        %v1375 = vpack.c.bf16 %v1374, %v1374
        %v1376 = vld [vmem:[%s7] sm:$0x1]
        %vm1377 = vcmask 31744
        %v1379 = vsel %vm1377, %v1376, 0
        %vm1381 = vcmask 1041408
        %v1383 = vsel %vm1381, %v1375, 0
        %1385 = vmatprep.subr.bf16.mxu0 0
        %1386 = vmatpush1.bf16.msra.mxu0 %v1383
        %1387 = vmatprep.subr.bf16.mxu0 0
        %1388 = vmatpush1.bf16.msra.mxu0 0
        %1389 = vmatprep.subr.bf16.mxu0 0
        %1390 = vmatpush1.bf16.msra.mxu0 0
        %1391 = vmatprep.subr.bf16.mxu0 0
        %1392 = vmatpush1.bf16.msra.mxu0 0
        %1393 = vmatprep.subr.bf16.mxu0 0
        %1394 = vmatpush1.bf16.msra.mxu0 0
        %1395 = vmatprep.subr.bf16.mxu0 0
        %1396 = vmatpush1.bf16.msra.mxu0 0
        %1397 = vmatprep.subr.bf16.mxu0 0
        %1398 = vmatpush1.bf16.msra.mxu0 0
        %1399 = vmatprep.subr.bf16.mxu0 0
        %1400 = vmatpush1.bf16.msra.mxu0 0
        %1401 = vmatprep.subr.bf16.mxu0 0
        %1402 = vmatpush1.bf16.msra.mxu0 0
        %1403 = vmatprep.subr.bf16.mxu0 0
        %1404 = vmatpush1.bf16.msra.mxu0 0
        %1405 = vmatprep.subr.bf16.mxu0 0
        %1406 = vmatpush1.bf16.msra.mxu0 0
        %1407 = vmatprep.subr.bf16.mxu0 0
        %1408 = vmatpush1.bf16.msra.mxu0 0
        %1409 = vmatprep.subr.bf16.mxu0 0
        %1410 = vmatpush1.bf16.msra.mxu0 0
        %1411 = vmatprep.subr.bf16.mxu0 0
        %1412 = vmatpush1.bf16.msra.mxu0 0
        %1413 = vmatprep.subr.bf16.mxu0 0
        %1414 = vmatpush1.bf16.msra.mxu0 0
        %1415 = vmatprep.subr.bf16.mxu0 0
        %1416 = vmatpush1.bf16.msra.mxu0 0
        %1417 = vmatprep.mubr.bf16.mxu0 0
        %1418 = vmatmul.mubr.bf16.gmra.mrb[0].mxu0 %v1379
        %v1419 = vpop.f32.mrb[0].mxu0
        %v1420 = vadd.f32 0.0, %v1419
        %v1421 = vpop.f32.mrb[0].mxu0
        %v1422 = vpop.f32.mrb[0].mxu0
        %v1423 = vpop.f32.mrb[0].mxu0
        %1424 = vdwg.mxu0
        %v1425 = vpack.c.bf16 %v1420, %v1420
        %v1426 = vld [vmem:[#allocation13] sm:$0xf]
        %v1427 = vld [vmem:[#allocation13 + $0x4] sm:$0xf]
        %v1428 = vld [vmem:[#allocation13 + $0x8] sm:$0xf]
        %v1429 = vld [vmem:[#allocation13 + $0xc] sm:$0xf]
        %s1430 = scalar_lea.vmem %s7, 1
        %v1431 = vld [vmem:[%s1430] sm:$0x1]
        %v1433 = vsel %vm1377, %v1431, 0
        %1435 = vmatprep.subr.bf16.mxu0 0
        %1436 = vmatpush1.bf16.msra.mxu0 %v1383
        %1437 = vmatprep.subr.bf16.mxu0 0
        %1438 = vmatpush1.bf16.msra.mxu0 0
        %1439 = vmatprep.subr.bf16.mxu0 0
        %1440 = vmatpush1.bf16.msra.mxu0 0
        %1441 = vmatprep.subr.bf16.mxu0 0
        %1442 = vmatpush1.bf16.msra.mxu0 0
        %1443 = vmatprep.subr.bf16.mxu0 0
        %1444 = vmatpush1.bf16.msra.mxu0 0
        %1445 = vmatprep.subr.bf16.mxu0 0
        %1446 = vmatpush1.bf16.msra.mxu0 0
        %1447 = vmatprep.subr.bf16.mxu0 0
        %1448 = vmatpush1.bf16.msra.mxu0 0
        %1449 = vmatprep.subr.bf16.mxu0 0
        %1450 = vmatpush1.bf16.msra.mxu0 0
        %1451 = vmatprep.subr.bf16.mxu0 0
        %1452 = vmatpush1.bf16.msra.mxu0 0
        %1453 = vmatprep.subr.bf16.mxu0 0
        %1454 = vmatpush1.bf16.msra.mxu0 0
        %1455 = vmatprep.subr.bf16.mxu0 0
        %1456 = vmatpush1.bf16.msra.mxu0 0
        %1457 = vmatprep.subr.bf16.mxu0 0
        %1458 = vmatpush1.bf16.msra.mxu0 0
        %1459 = vmatprep.subr.bf16.mxu0 0
        %1460 = vmatpush1.bf16.msra.mxu0 0
        %1461 = vmatprep.subr.bf16.mxu0 0
        %1462 = vmatpush1.bf16.msra.mxu0 0
        %1463 = vmatprep.subr.bf16.mxu0 0
        %1464 = vmatpush1.bf16.msra.mxu0 0
        %1465 = vmatprep.subr.bf16.mxu0 0
        %1466 = vmatpush1.bf16.msra.mxu0 0
        %1467 = vmatprep.mubr.bf16.mxu0 0
        %1468 = vmatmul.mubr.bf16.gmra.mrb[0].mxu0 %v1433
        %v1469 = vpop.f32.mrb[0].mxu0
        %v1470 = vadd.f32 0.0, %v1469
        %v1471 = vpop.f32.mrb[0].mxu0
        %v1472 = vpop.f32.mrb[0].mxu0
        %v1473 = vpop.f32.mrb[0].mxu0
        %1474 = vdwg.mxu0
        %v1475 = vpack.c.bf16 %v1470, %v1470
        %s1476 = scalar_lea.vmem [#allocation13], 16
        %v1477 = vld [vmem:[%s1476] sm:$0xf]
        %v1478 = vld [vmem:[%s1476 + $0x4] sm:$0xf]
        %v1479 = vld [vmem:[%s1476 + $0x8] sm:$0xf]
        %v1480 = vld [vmem:[%s1476 + $0xc] sm:$0xf]
        %v1485 = vunpack.c.l.b16 %v1477
        %v1486 = vunpack.c.l.b16 %v1478
        %v1487 = vunpack.c.l.b16 %v1479
        %v1488 = vunpack.c.l.b16 %v1480
        %v1489 = vpack.c.b16 %v1486, %v1485
        %v1490 = vpack.c.b16 %v1488, %v1487
        %v1494 = vsel %vm1053, %v1475, 0
        %1496 = vmatprep.subr.bf16.mxu0 0
        %1497 = vmatpush1.bf16.msra.mxu0 %v1489
        %1498 = vmatprep.subr.bf16.mxu0 0
        %1499 = vmatpush1.bf16.msra.mxu0 %v1490
        %1500 = vmatprep.subr.bf16.mxu0 0
        %1501 = vmatpush1.bf16.msra.mxu0 0
        %1502 = vmatprep.subr.bf16.mxu0 0
        %1503 = vmatpush1.bf16.msra.mxu0 0
        %1504 = vmatprep.subr.bf16.mxu0 0
        %1505 = vmatpush1.bf16.msra.mxu0 0
        %1506 = vmatprep.subr.bf16.mxu0 0
        %1507 = vmatpush1.bf16.msra.mxu0 0
        %1508 = vmatprep.subr.bf16.mxu0 0
        %1509 = vmatpush1.bf16.msra.mxu0 0
        %1510 = vmatprep.subr.bf16.mxu0 0
        %1511 = vmatpush1.bf16.msra.mxu0 0
        %1512 = vmatprep.subr.bf16.mxu0 0
        %1513 = vmatpush1.bf16.msra.mxu0 0
        %1514 = vmatprep.subr.bf16.mxu0 0
        %1515 = vmatpush1.bf16.msra.mxu0 0
        %1516 = vmatprep.subr.bf16.mxu0 0
        %1517 = vmatpush1.bf16.msra.mxu0 0
        %1518 = vmatprep.subr.bf16.mxu0 0
        %1519 = vmatpush1.bf16.msra.mxu0 0
        %1520 = vmatprep.subr.bf16.mxu0 0
        %1521 = vmatpush1.bf16.msra.mxu0 0
        %1522 = vmatprep.subr.bf16.mxu0 0
        %1523 = vmatpush1.bf16.msra.mxu0 0
        %1524 = vmatprep.subr.bf16.mxu0 0
        %1525 = vmatpush1.bf16.msra.mxu0 0
        %1526 = vmatprep.subr.bf16.mxu0 0
        %1527 = vmatpush1.bf16.msra.mxu0 0
        %1528 = vmatprep.mubr.bf16.mxu0 0
        %1529 = vmatmul.mubr.bf16.gmra.mrb[0].mxu0 %v1494
        %v1530 = vpop.f32.mrb[0].mxu0
        %v1531 = vadd.f32 0.0, %v1530
        %v1532 = vpop.f32.mrb[0].mxu0
        %v1533 = vpop.f32.mrb[0].mxu0
        %v1534 = vpop.f32.mrb[0].mxu0
        %1535 = vdwg.mxu0
        %v1540 = vunpack.c.l.b16 %v1426
        %v1541 = vunpack.c.l.b16 %v1427
        %v1542 = vunpack.c.l.b16 %v1428
        %v1543 = vunpack.c.l.b16 %v1429
        %v1544 = vpack.c.b16 %v1541, %v1540
        %v1545 = vpack.c.b16 %v1543, %v1542
        %v1549 = vsel %vm1053, %v1425, 0
        %1551 = vmatprep.subr.bf16.mxu0 0
        %1552 = vmatpush1.bf16.msra.mxu0 %v1544
        %1553 = vmatprep.subr.bf16.mxu0 0
        %1554 = vmatpush1.bf16.msra.mxu0 %v1545
        %1555 = vmatprep.subr.bf16.mxu0 0
        %1556 = vmatpush1.bf16.msra.mxu0 0
        %1557 = vmatprep.subr.bf16.mxu0 0
        %1558 = vmatpush1.bf16.msra.mxu0 0
        %1559 = vmatprep.subr.bf16.mxu0 0
        %1560 = vmatpush1.bf16.msra.mxu0 0
        %1561 = vmatprep.subr.bf16.mxu0 0
        %1562 = vmatpush1.bf16.msra.mxu0 0
        %1563 = vmatprep.subr.bf16.mxu0 0
        %1564 = vmatpush1.bf16.msra.mxu0 0
        %1565 = vmatprep.subr.bf16.mxu0 0
        %1566 = vmatpush1.bf16.msra.mxu0 0
        %1567 = vmatprep.subr.bf16.mxu0 0
        %1568 = vmatpush1.bf16.msra.mxu0 0
        %1569 = vmatprep.subr.bf16.mxu0 0
        %1570 = vmatpush1.bf16.msra.mxu0 0
        %1571 = vmatprep.subr.bf16.mxu0 0
        %1572 = vmatpush1.bf16.msra.mxu0 0
        %1573 = vmatprep.subr.bf16.mxu0 0
        %1574 = vmatpush1.bf16.msra.mxu0 0
        %1575 = vmatprep.subr.bf16.mxu0 0
        %1576 = vmatpush1.bf16.msra.mxu0 0
        %1577 = vmatprep.subr.bf16.mxu0 0
        %1578 = vmatpush1.bf16.msra.mxu0 0
        %1579 = vmatprep.subr.bf16.mxu0 0
        %1580 = vmatpush1.bf16.msra.mxu0 0
        %1581 = vmatprep.subr.bf16.mxu0 0
        %1582 = vmatpush1.bf16.msra.mxu0 0
        %1583 = vmatprep.mubr.bf16.mxu0 0
        %1584 = vmatmul.mubr.bf16.gmra.mrb[0].mxu0 %v1549
        %v1585 = vpop.f32.mrb[0].mxu0
        %v1586 = vadd.f32 %v1531, %v1585
        %v1587 = vpop.f32.mrb[0].mxu0
        %v1588 = vpop.f32.mrb[0].mxu0
        %v1589 = vpop.f32.mrb[0].mxu0
        %1590 = vdwg.mxu0
        %s1591 = scalar_lea.vmem %s7, 2
        %v1592 = vld [vmem:[%s1591] sm:$0x1]
        %v1594 = vsel %vm1377, %v1592, 0
        %1596 = vmatprep.subr.bf16.mxu0 0
        %1597 = vmatpush1.bf16.msra.mxu0 %v1383
        %1598 = vmatprep.subr.bf16.mxu0 0
        %1599 = vmatpush1.bf16.msra.mxu0 0
        %1600 = vmatprep.subr.bf16.mxu0 0
        %1601 = vmatpush1.bf16.msra.mxu0 0
        %1602 = vmatprep.subr.bf16.mxu0 0
        %1603 = vmatpush1.bf16.msra.mxu0 0
        %1604 = vmatprep.subr.bf16.mxu0 0
        %1605 = vmatpush1.bf16.msra.mxu0 0
        %1606 = vmatprep.subr.bf16.mxu0 0
        %1607 = vmatpush1.bf16.msra.mxu0 0
        %1608 = vmatprep.subr.bf16.mxu0 0
        %1609 = vmatpush1.bf16.msra.mxu0 0
        %1610 = vmatprep.subr.bf16.mxu0 0
        %1611 = vmatpush1.bf16.msra.mxu0 0
        %1612 = vmatprep.subr.bf16.mxu0 0
        %1613 = vmatpush1.bf16.msra.mxu0 0
        %1614 = vmatprep.subr.bf16.mxu0 0
        %1615 = vmatpush1.bf16.msra.mxu0 0
        %1616 = vmatprep.subr.bf16.mxu0 0
        %1617 = vmatpush1.bf16.msra.mxu0 0
        %1618 = vmatprep.subr.bf16.mxu0 0
        %1619 = vmatpush1.bf16.msra.mxu0 0
        %1620 = vmatprep.subr.bf16.mxu0 0
        %1621 = vmatpush1.bf16.msra.mxu0 0
        %1622 = vmatprep.subr.bf16.mxu0 0
        %1623 = vmatpush1.bf16.msra.mxu0 0
        %1624 = vmatprep.subr.bf16.mxu0 0
        %1625 = vmatpush1.bf16.msra.mxu0 0
        %1626 = vmatprep.subr.bf16.mxu0 0
        %1627 = vmatpush1.bf16.msra.mxu0 0
        %1628 = vmatprep.mubr.bf16.mxu0 0
        %1629 = vmatmul.mubr.bf16.gmra.mrb[0].mxu0 %v1594
        %v1630 = vpop.f32.mrb[0].mxu0
        %v1631 = vadd.f32 0.0, %v1630
        %v1632 = vpop.f32.mrb[0].mxu0
        %v1633 = vpop.f32.mrb[0].mxu0
        %v1634 = vpop.f32.mrb[0].mxu0
        %1635 = vdwg.mxu0
        %v1636 = vpack.c.bf16 %v1631, %v1631
        %s1637 = scalar_lea.vmem [#allocation13], 32
        %v1638 = vld [vmem:[%s1637] sm:$0xf]
        %v1639 = vld [vmem:[%s1637 + $0x4] sm:$0xf]
        %v1640 = vld [vmem:[%s1637 + $0x8] sm:$0xf]
        %v1641 = vld [vmem:[%s1637 + $0xc] sm:$0xf]
        %v1646 = vunpack.c.l.b16 %v1638
        %v1647 = vunpack.c.l.b16 %v1639
        %v1648 = vunpack.c.l.b16 %v1640
        %v1649 = vunpack.c.l.b16 %v1641
        %v1650 = vpack.c.b16 %v1647, %v1646
        %v1651 = vpack.c.b16 %v1649, %v1648
        %v1655 = vsel %vm1053, %v1636, 0
        %1657 = vmatprep.subr.bf16.mxu0 0
        %1658 = vmatpush1.bf16.msra.mxu0 %v1650
        %1659 = vmatprep.subr.bf16.mxu0 0
        %1660 = vmatpush1.bf16.msra.mxu0 %v1651
        %1661 = vmatprep.subr.bf16.mxu0 0
        %1662 = vmatpush1.bf16.msra.mxu0 0
        %1663 = vmatprep.subr.bf16.mxu0 0
        %1664 = vmatpush1.bf16.msra.mxu0 0
        %1665 = vmatprep.subr.bf16.mxu0 0
        %1666 = vmatpush1.bf16.msra.mxu0 0
        %1667 = vmatprep.subr.bf16.mxu0 0
        %1668 = vmatpush1.bf16.msra.mxu0 0
        %1669 = vmatprep.subr.bf16.mxu0 0
        %1670 = vmatpush1.bf16.msra.mxu0 0
        %1671 = vmatprep.subr.bf16.mxu0 0
        %1672 = vmatpush1.bf16.msra.mxu0 0
        %1673 = vmatprep.subr.bf16.mxu0 0
        %1674 = vmatpush1.bf16.msra.mxu0 0
        %1675 = vmatprep.subr.bf16.mxu0 0
        %1676 = vmatpush1.bf16.msra.mxu0 0
        %1677 = vmatprep.subr.bf16.mxu0 0
        %1678 = vmatpush1.bf16.msra.mxu0 0
        %1679 = vmatprep.subr.bf16.mxu0 0
        %1680 = vmatpush1.bf16.msra.mxu0 0
        %1681 = vmatprep.subr.bf16.mxu0 0
        %1682 = vmatpush1.bf16.msra.mxu0 0
        %1683 = vmatprep.subr.bf16.mxu0 0
        %1684 = vmatpush1.bf16.msra.mxu0 0
        %1685 = vmatprep.subr.bf16.mxu0 0
        %1686 = vmatpush1.bf16.msra.mxu0 0
        %1687 = vmatprep.subr.bf16.mxu0 0
        %1688 = vmatpush1.bf16.msra.mxu0 0
        %1689 = vmatprep.mubr.bf16.mxu0 0
        %1690 = vmatmul.mubr.bf16.gmra.mrb[0].mxu0 %v1655
        %v1691 = vpop.f32.mrb[0].mxu0
        %v1692 = vadd.f32 0.0, %v1691
        %v1693 = vpop.f32.mrb[0].mxu0
        %v1694 = vpop.f32.mrb[0].mxu0
        %v1695 = vpop.f32.mrb[0].mxu0
        %1696 = vdwg.mxu0
        %v1697 = vadd.f32 %v1586, %v1692
        %s1698 = scalar_lea.vmem %s7, 3
        %v1699 = vld [vmem:[%s1698] sm:$0x1]
        %v1701 = vsel %vm1377, %v1699, 0
        %1703 = vmatprep.subr.bf16.mxu0 0
        %1704 = vmatpush1.bf16.msra.mxu0 %v1383
        %1705 = vmatprep.subr.bf16.mxu0 0
        %1706 = vmatpush1.bf16.msra.mxu0 0
        %1707 = vmatprep.subr.bf16.mxu0 0
        %1708 = vmatpush1.bf16.msra.mxu0 0
        %1709 = vmatprep.subr.bf16.mxu0 0
        %1710 = vmatpush1.bf16.msra.mxu0 0
        %1711 = vmatprep.subr.bf16.mxu0 0
        %1712 = vmatpush1.bf16.msra.mxu0 0
        %1713 = vmatprep.subr.bf16.mxu0 0
        %1714 = vmatpush1.bf16.msra.mxu0 0
        %1715 = vmatprep.subr.bf16.mxu0 0
        %1716 = vmatpush1.bf16.msra.mxu0 0
        %1717 = vmatprep.subr.bf16.mxu0 0
        %1718 = vmatpush1.bf16.msra.mxu0 0
        %1719 = vmatprep.subr.bf16.mxu0 0
        %1720 = vmatpush1.bf16.msra.mxu0 0
        %1721 = vmatprep.subr.bf16.mxu0 0
        %1722 = vmatpush1.bf16.msra.mxu0 0
        %1723 = vmatprep.subr.bf16.mxu0 0
        %1724 = vmatpush1.bf16.msra.mxu0 0
        %1725 = vmatprep.subr.bf16.mxu0 0
        %1726 = vmatpush1.bf16.msra.mxu0 0
        %1727 = vmatprep.subr.bf16.mxu0 0
        %1728 = vmatpush1.bf16.msra.mxu0 0
        %1729 = vmatprep.subr.bf16.mxu0 0
        %1730 = vmatpush1.bf16.msra.mxu0 0
        %1731 = vmatprep.subr.bf16.mxu0 0
        %1732 = vmatpush1.bf16.msra.mxu0 0
        %1733 = vmatprep.subr.bf16.mxu0 0
        %1734 = vmatpush1.bf16.msra.mxu0 0
        %1735 = vmatprep.mubr.bf16.mxu0 0
        %1736 = vmatmul.mubr.bf16.gmra.mrb[0].mxu0 %v1701
        %v1737 = vpop.f32.mrb[0].mxu0
        %v1738 = vadd.f32 0.0, %v1737
        %v1739 = vpop.f32.mrb[0].mxu0
        %v1740 = vpop.f32.mrb[0].mxu0
        %v1741 = vpop.f32.mrb[0].mxu0
        %1742 = vdwg.mxu0
        %v1743 = vpack.c.bf16 %v1738, %v1738
        %s1744 = scalar_lea.vmem [#allocation13], 48
        %v1745 = vld [vmem:[%s1744] sm:$0xf]
        %v1746 = vld [vmem:[%s1744 + $0x4] sm:$0xf]
        %v1747 = vld [vmem:[%s1744 + $0x8] sm:$0xf]
        %v1748 = vld [vmem:[%s1744 + $0xc] sm:$0xf]
        %v1753 = vunpack.c.l.b16 %v1745
        %v1754 = vunpack.c.l.b16 %v1746
        %v1755 = vunpack.c.l.b16 %v1747
        %v1756 = vunpack.c.l.b16 %v1748
        %v1757 = vpack.c.b16 %v1754, %v1753
        %v1758 = vpack.c.b16 %v1756, %v1755
        %v1762 = vsel %vm1053, %v1743, 0
        %1764 = vmatprep.subr.bf16.mxu0 0
        %1765 = vmatpush1.bf16.msra.mxu0 %v1757
        %1766 = vmatprep.subr.bf16.mxu0 0
        %1767 = vmatpush1.bf16.msra.mxu0 %v1758
        %1768 = vmatprep.subr.bf16.mxu0 0
        %1769 = vmatpush1.bf16.msra.mxu0 0
        %1770 = vmatprep.subr.bf16.mxu0 0
        %1771 = vmatpush1.bf16.msra.mxu0 0
        %1772 = vmatprep.subr.bf16.mxu0 0
        %1773 = vmatpush1.bf16.msra.mxu0 0
        %1774 = vmatprep.subr.bf16.mxu0 0
        %1775 = vmatpush1.bf16.msra.mxu0 0
        %1776 = vmatprep.subr.bf16.mxu0 0
        %1777 = vmatpush1.bf16.msra.mxu0 0
        %1778 = vmatprep.subr.bf16.mxu0 0
        %1779 = vmatpush1.bf16.msra.mxu0 0
        %1780 = vmatprep.subr.bf16.mxu0 0
        %1781 = vmatpush1.bf16.msra.mxu0 0
        %1782 = vmatprep.subr.bf16.mxu0 0
        %1783 = vmatpush1.bf16.msra.mxu0 0
        %1784 = vmatprep.subr.bf16.mxu0 0
        %1785 = vmatpush1.bf16.msra.mxu0 0
        %1786 = vmatprep.subr.bf16.mxu0 0
        %1787 = vmatpush1.bf16.msra.mxu0 0
        %1788 = vmatprep.subr.bf16.mxu0 0
        %1789 = vmatpush1.bf16.msra.mxu0 0
        %1790 = vmatprep.subr.bf16.mxu0 0
        %1791 = vmatpush1.bf16.msra.mxu0 0
        %1792 = vmatprep.subr.bf16.mxu0 0
        %1793 = vmatpush1.bf16.msra.mxu0 0
        %1794 = vmatprep.subr.bf16.mxu0 0
        %1795 = vmatpush1.bf16.msra.mxu0 0
        %1796 = vmatprep.mubr.bf16.mxu0 0
        %1797 = vmatmul.mubr.bf16.gmra.mrb[0].mxu0 %v1762
        %v1798 = vpop.f32.mrb[0].mxu0
        %v1799 = vadd.f32 0.0, %v1798
        %v1800 = vpop.f32.mrb[0].mxu0
        %v1801 = vpop.f32.mrb[0].mxu0
        %v1802 = vpop.f32.mrb[0].mxu0
        %1803 = vdwg.mxu0
        %v1804 = vadd.f32 %v1697, %v1799
        %v1805 = vld [vmem:[#allocation14] sm:$0x1]
        %v1807 = vlaneseq
        %v1808 = vshrl.u32 %v1807, 7
        %v1809 = vsub.s32 0, %v1808
        %v1810 = vrot.slane %v1805, %v1809
        %v1812 = vadd.f32 %v1804, %v1810
        %v1813 = vmax.f32 %v1812, 0.0
        %v1814 = vpack.c.bf16 %v1813, %v1813
        %v1815 = vld [vmem:[%s10] sm:$0xf]
        %v1816 = vld [vmem:[%s10 + $0x4] sm:$0xf]
        %v1817 = vld [vmem:[%s10 + $0x8] sm:$0xf]
        %v1818 = vld [vmem:[%s10 + $0xc] sm:$0xf]
        %s1819 = scalar_lea.vmem %s10, 16
        %v1820 = vld [vmem:[%s1819] sm:$0xf]
        %v1821 = vld [vmem:[%s1819 + $0x4] sm:$0xf]
        %v1822 = vld [vmem:[%s1819 + $0x8] sm:$0xf]
        %v1823 = vld [vmem:[%s1819 + $0xc] sm:$0xf]
        %v1825 = vshrl.u32 %v1814, 16
        %v1831 = vunpack.c.l.b16 %v1820
        %v1832 = vunpack.c.l.b16 %v1821
        %v1833 = vunpack.c.l.b16 %v1822
        %v1834 = vunpack.c.l.b16 %v1823
        %v1835 = vpack.c.b16 %v1832, %v1831
        %v1836 = vpack.c.b16 %v1834, %v1833
        %v1840 = vsel %vm1053, %v1825, 0
        %1842 = vmatprep.subr.bf16.mxu0 0
        %1843 = vmatpush1.bf16.msra.mxu0 %v1835
        %1844 = vmatprep.subr.bf16.mxu0 0
        %1845 = vmatpush1.bf16.msra.mxu0 %v1836
        %1846 = vmatprep.subr.bf16.mxu0 0
        %1847 = vmatpush1.bf16.msra.mxu0 0
        %1848 = vmatprep.subr.bf16.mxu0 0
        %1849 = vmatpush1.bf16.msra.mxu0 0
        %1850 = vmatprep.subr.bf16.mxu0 0
        %1851 = vmatpush1.bf16.msra.mxu0 0
        %1852 = vmatprep.subr.bf16.mxu0 0
        %1853 = vmatpush1.bf16.msra.mxu0 0
        %1854 = vmatprep.subr.bf16.mxu0 0
        %1855 = vmatpush1.bf16.msra.mxu0 0
        %1856 = vmatprep.subr.bf16.mxu0 0
        %1857 = vmatpush1.bf16.msra.mxu0 0
        %1858 = vmatprep.subr.bf16.mxu0 0
        %1859 = vmatpush1.bf16.msra.mxu0 0
        %1860 = vmatprep.subr.bf16.mxu0 0
        %1861 = vmatpush1.bf16.msra.mxu0 0
        %1862 = vmatprep.subr.bf16.mxu0 0
        %1863 = vmatpush1.bf16.msra.mxu0 0
        %1864 = vmatprep.subr.bf16.mxu0 0
        %1865 = vmatpush1.bf16.msra.mxu0 0
        %1866 = vmatprep.subr.bf16.mxu0 0
        %1867 = vmatpush1.bf16.msra.mxu0 0
        %1868 = vmatprep.subr.bf16.mxu0 0
        %1869 = vmatpush1.bf16.msra.mxu0 0
        %1870 = vmatprep.subr.bf16.mxu0 0
        %1871 = vmatpush1.bf16.msra.mxu0 0
        %1872 = vmatprep.subr.bf16.mxu0 0
        %1873 = vmatpush1.bf16.msra.mxu0 0
        %1874 = vmatprep.mubr.bf16.mxu0 0
        %1875 = vmatmul.mubr.bf16.gmra.mrb[0].mxu0 %v1840
        %v1876 = vpop.f32.mrb[0].mxu0
        %v1877 = vadd.f32 0.0, %v1876
        %v1878 = vpop.f32.mrb[0].mxu0
        %v1879 = vpop.f32.mrb[0].mxu0
        %v1880 = vpop.f32.mrb[0].mxu0
        %1881 = vdwg.mxu0
        %v1886 = vunpack.c.l.b16 %v1815
        %v1887 = vunpack.c.l.b16 %v1816
        %v1888 = vunpack.c.l.b16 %v1817
        %v1889 = vunpack.c.l.b16 %v1818
        %v1890 = vpack.c.b16 %v1887, %v1886
        %v1891 = vpack.c.b16 %v1889, %v1888
        %v1894 = vsel %vm1053, %v1814, 0
        %1896 = vmatprep.subr.bf16.mxu0 0
        %1897 = vmatpush1.bf16.msra.mxu0 %v1890
        %1898 = vmatprep.subr.bf16.mxu0 0
        %1899 = vmatpush1.bf16.msra.mxu0 %v1891
        %1900 = vmatprep.subr.bf16.mxu0 0
        %1901 = vmatpush1.bf16.msra.mxu0 0
        %1902 = vmatprep.subr.bf16.mxu0 0
        %1903 = vmatpush1.bf16.msra.mxu0 0
        %1904 = vmatprep.subr.bf16.mxu0 0
        %1905 = vmatpush1.bf16.msra.mxu0 0
        %1906 = vmatprep.subr.bf16.mxu0 0
        %1907 = vmatpush1.bf16.msra.mxu0 0
        %1908 = vmatprep.subr.bf16.mxu0 0
        %1909 = vmatpush1.bf16.msra.mxu0 0
        %1910 = vmatprep.subr.bf16.mxu0 0
        %1911 = vmatpush1.bf16.msra.mxu0 0
        %1912 = vmatprep.subr.bf16.mxu0 0
        %1913 = vmatpush1.bf16.msra.mxu0 0
        %1914 = vmatprep.subr.bf16.mxu0 0
        %1915 = vmatpush1.bf16.msra.mxu0 0
        %1916 = vmatprep.subr.bf16.mxu0 0
        %1917 = vmatpush1.bf16.msra.mxu0 0
        %1918 = vmatprep.subr.bf16.mxu0 0
        %1919 = vmatpush1.bf16.msra.mxu0 0
        %1920 = vmatprep.subr.bf16.mxu0 0
        %1921 = vmatpush1.bf16.msra.mxu0 0
        %1922 = vmatprep.subr.bf16.mxu0 0
        %1923 = vmatpush1.bf16.msra.mxu0 0
        %1924 = vmatprep.subr.bf16.mxu0 0
        %1925 = vmatpush1.bf16.msra.mxu0 0
        %1926 = vmatprep.subr.bf16.mxu0 0
        %1927 = vmatpush1.bf16.msra.mxu0 0
        %1928 = vmatprep.mubr.bf16.mxu0 0
        %1929 = vmatmul.mubr.bf16.gmra.mrb[0].mxu0 %v1894
        %v1930 = vpop.f32.mrb[0].mxu0
        %v1931 = vadd.f32 %v1877, %v1930
        %v1932 = vpop.f32.mrb[0].mxu0
        %v1933 = vpop.f32.mrb[0].mxu0
        %v1934 = vpop.f32.mrb[0].mxu0
        %1935 = vdwg.mxu0
        %v1936 = vld [vmem:[%s11] sm:$0x1]
        %v1937 = vadd.f32 %v1931, %v1936
        %1938 = vst [vmem:[%s528] sm:$0x1] %v1937
        %s1939 = sand.u32 %s298, 1
        %s1940 = scalar_lea.sflag [#allocation4], %s1939
        %s1941 = sand.u32 %s298, 1
        %s1942 = scalar_lea.vmem [#allocation16], %s1941
        // Predicated region
        $region101: #{tpu_custom_call.1} parent=67 // pred_check
          %p1943 = pneg %p308
        $region102: #{tpu_custom_call.1} parent=67 // pred_check_branch
          %1945 = sbr.rel (%p1943) target = $region104
        $region103: #{tpu_custom_call.1} parent=67 // pred_region
          %s1947 = ssub.s32 16, 16
          %1948 = vsyncadd %s1940, %s1947
          %s1949 = smul.addr %s33, 16
          %s1950 = scalar_lea.hbm %s12, %s1949
          %s1952 = sshll.u32 %s1942, 4
          %s1953 = int_to_ptr.vmem [resolvable:$true] %s1952
          %1955 = dma.vmem_to_hbm [thread:$0]  %s1953, 16, %s1950, %s1940
        $region104: #{tpu_custom_call.1} parent=67 // pred_fallthru
          _
      $region68: #{tpu_custom_call.1} parent=5 // pred_fallthru
        _
      %p1956 = scmp.le.s32.totalorder 2, %s28
      // Predicated region
      $region105: #{tpu_custom_call.1} parent=5 // pred_check
        %p1957 = pneg %p1956
      $region106: #{tpu_custom_call.1} parent=5 // pred_check_branch
        %1959 = sbr.rel (%p1957) target = $region108
      $region107: #{tpu_custom_call.1} parent=5 // pred_region
        %s1960 = ssub.s32 %s28, 2
        // Predicated region
        $region109: #{tpu_custom_call.1} parent=107 // pred_check
          %p1961 = pneg %p314
        $region110: #{tpu_custom_call.1} parent=107 // pred_check_branch
          %1963 = sbr.rel (%p1961) target = $region112
        $region111: #{tpu_custom_call.1} parent=107 // pred_region
          %s1964 = sand.u32 %s299, 1
          %s1965 = scalar_lea.sflag [#allocation4], %s1964
          %s1966 = sand.u32 %s299, 1
          %s1967 = scalar_lea.vmem [#allocation16], %s1966
          %1968 = dma.done %s1965, 16
        $region112: #{tpu_custom_call.1} parent=107 // pred_fallthru
          _
      $region108: #{tpu_custom_call.1} parent=5 // pred_fallthru
        _
    $region6: #{tpu_custom_call.1} parent=1 // loop_footer
      %s32 = sadd.s32 1, %s28
    $region7: #{tpu_custom_call.1} parent=1 // loop_footer_branch
      %27 = sbr.rel target = $region3
    $region8: #{tpu_custom_call.1} parent=1 // loop_exit
      _
    %1969 = vsyncpa [#allocation3], 1
    %s1970 = scalar_lea.sflag [#allocation3], 1
    %1971 = vsyncpa %s1970, 1
    %1972 = vsyncpa [#allocation6], 1
    %1973 = vsyncpa [#allocation9], 1
    %1974 = vsyncpa [#allocation12], 1
    %1975 = vsyncpa [#allocation15], 1
    %1976 = vsyncpa [#allocation4], 1
    %s1977 = scalar_lea.sflag [#allocation4], 1
    %1978 = vsyncpa %s1977, 1

</llo_original>
